<compile_context>
chip_gen: v7x
topology: tpu7x:2x2x1
jax: 0.10.0
libtpu: 0.0.40
codegen_flags: <defaults>
</compile_context>

<pallas_src>
import functools

import jax
import jax.numpy as jnp
import numpy as np
from jax.experimental import pallas as pl
from jax.experimental.pallas import tpu as pltpu


def _dot(a, b):
    # bf16 x bf16 -> f32 accumulation on the MXU.
    return jnp.dot(a, b, preferred_element_type=jnp.float32)


def wavenet_dilations(layer_size, stack_size):
    return tuple([2 ** i for i in range(layer_size)] * stack_size)


def receptive_fields(layer_size, stack_size):
    return sum(wavenet_dilations(layer_size, stack_size)) + stack_size


def _round_up(a, m):
    return ((a + m - 1) // m) * m


def _vmem_limit_bytes():
    # 128 MiB on v5e/v6e, 64 MiB on v7x; leave headroom for compiler scratch.
    try:
        cap = int(pltpu.get_tpu_info().vmem_capacity_bytes)
    except Exception:
        cap = 64 * 1024 * 1024  # conservative fallback, safe on every chip
    return max(32 * 1024 * 1024, (cap * 3) // 4)


# ---------------------------------------------------------------------------
# Pallas kernel: one (batch, time-tile) grid step.
# All activations are (channels, time): channels on sublanes, time on lanes.
# ---------------------------------------------------------------------------
def wavenet_kernel(audio_hbm, wc0_ref, wc1_ref, wdil0_ref, wdil1_ref,
                   wrs_ref, brs_ref, wd1_ref, bd1_ref, wd2_ref, bd2_ref,
                   out_ref, xwin_ref, dma_sem, *,
                   layer_size, stack_size, res_ch, skip_ch, halo, time_tile):
    b = pl.program_id(0)
    k = pl.program_id(1)
    window = time_tile + halo

    # Manual halo DMA: overlapping windows -> audio stays in HBM and each step
    # copies padded-audio columns [k*time_tile, k*time_tile + window) to VMEM.
    start = pl.multiple_of(k * time_tile, 128)
    cp = pltpu.make_async_copy(
        audio_hbm.at[pl.ds(b, 1), :, pl.ds(start, window)], xwin_ref, dma_sem)
    cp.start()
    cp.wait()

    x = xwin_ref[0]                                           # (Cin, W) f32

    # Causal conv (kernel=2): h[u] = W0 @ x[u-1] + W1 @ x[u].
    # The lane roll wraps column 0, but columns < halo are never read
    # downstream (halo >= total look-back), so no masking is needed.
    x_prev = pltpu.roll(x, shift=1, axis=1).astype(jnp.bfloat16)
    h = _dot(wc0_ref[...], x_prev) + _dot(wc1_ref[...],
                                          x.astype(jnp.bfloat16))  # (R, W) f32

    skip0 = jnp.zeros((skip_ch, time_tile), jnp.float32)

    def stack_body(s_idx, carry):
        h, skip_sum = carry
        for j in range(layer_size):               # static dilations unrolled
            d = 2 ** j
            li = s_idx * layer_size + j           # dynamic layer index
            h16 = h.astype(jnp.bfloat16)
            h_shift = pltpu.roll(h, shift=d, axis=1).astype(jnp.bfloat16)
            # Dilated conv: two (R, R) taps, no concat copy.
            pre = _dot(wdil0_ref[li], h_shift) + _dot(wdil1_ref[li], h16)
            # gated = tanh(pre) * sigmoid(pre) == (u^2 - u) / (u^2 + 1).
            u = jnp.exp(jnp.clip(pre, -30.0, 30.0))
            u2 = u * u
            gated = (u2 - u) * pl.reciprocal(u2 + 1.0, approx=True)
            # Fused residual(R->R) + skip(R->S) 1x1 convs: one (R+S, R) matmul.
            rs = _dot(wrs_ref[li], gated.astype(jnp.bfloat16)) + brs_ref[li]
            h = rs[:res_ch, :] + h                            # residual
            # Accumulate skip only over the valid, lane-aligned tile window.
            skip_sum = skip_sum + rs[res_ch:, halo:]
        return h, skip_sum

    _, skip_sum = jax.lax.fori_loop(0, stack_size, stack_body, (h, skip0))

    # Dense head on the (S, time_tile) valid window.
    y = jnp.maximum(skip_sum, 0.0)
    y = _dot(wd1_ref[...], y.astype(jnp.bfloat16)) + bd1_ref[...]
    y = jnp.maximum(y, 0.0)
    y = _dot(wd2_ref[...], y.astype(jnp.bfloat16)) + bd2_ref[...]  # (Cin, Tt)

    # Softmax over channels (sublanes); lane-dense (Cin, time_tile) store.
    m = jnp.max(y, axis=0, keepdims=True)
    e = jnp.exp(y - m)
    out_ref[...] = e * pl.reciprocal(jnp.sum(e, axis=0, keepdims=True),
                                     approx=True)


# ---------------------------------------------------------------------------
# Wrapper: padding for lane alignment, pallas_call plumbing (NCL in, NCL out).
# ---------------------------------------------------------------------------
def init_params(key, input_channels, residual_channels, skip_channels, n_blocks):
    """Weights channels-first (out = W @ in); matmul weights bf16, biases f32."""
    ks = jax.random.split(key, 10)
    s = 0.3
    Cin, R, S = input_channels, residual_channels, skip_channels

    def w(k, shape):
        return (jax.random.normal(k, shape) * s).astype(jnp.bfloat16)

    def b(k, shape):
        return (jax.random.normal(k, shape) * s).astype(jnp.float32)

    return {
        "wc0":   w(ks[0], (R, Cin)),              # causal tap on x[t-1]
        "wc1":   w(ks[1], (R, Cin)),              # causal tap on x[t]
        "wdil0": w(ks[2], (n_blocks, R, R)),      # dilated tap on h[t-d]
        "wdil1": w(ks[3], (n_blocks, R, R)),      # dilated tap on h[t]
        "wrs":   w(ks[4], (n_blocks, R + S, R)),  # fused residual + skip 1x1
        "brs":   b(ks[5], (n_blocks, R + S, 1)),
        "wd1":   w(ks[6], (S, S)),
        "bd1":   b(ks[7], (S, 1)),
        "wd2":   w(ks[8], (Cin, S)),
        "bd2":   b(ks[9], (Cin, 1)),
    }


def wavenet_forward(audio_ncl, params, layer_size, stack_size, *, time_tile=1024):
    """audio_ncl: (B, Cin, T) float32 (PyTorch NCL). Returns (B, Cin, T - rf)."""
    rf = receptive_fields(layer_size, stack_size)
    B, Cin, T = audio_ncl.shape
    t_out = T - rf
    assert t_out >= 1, "input time steps must exceed the receptive field"
    R = params["wdil0"].shape[1]
    S = params["wd1"].shape[0]

    halo = _round_up(rf, 128)                     # 128-aligned, >= look-back
    assert halo % 128 == 0 and halo >= rf
    tt = min(_round_up(time_tile, 128), _round_up(t_out, 128))
    n_t = -(-t_out // tt)
    t_out_p = n_t * tt
    left = halo - (rf - 1)                        # >= 1 (supplies x[-1] = 0)
    right = max(t_out_p - t_out - 1, 0)
    window = tt + halo

    x = jnp.pad(audio_ncl.astype(jnp.float32),
                ((0, 0), (0, 0), (left, right)))
    assert (n_t - 1) * tt + window <= x.shape[-1]

    kernel = functools.partial(
        wavenet_kernel, layer_size=layer_size, stack_size=stack_size,
        res_ch=R, skip_ch=S, halo=halo, time_tile=tt)

    param_order = ("wc0", "wc1", "wdil0", "wdil1", "wrs", "brs",
                   "wd1", "bd1", "wd2", "bd2")
    param_vals = [params[k] for k in param_order]

    # Audio stays in HBM (manual windowed DMA); weights are small constant
    # blocks fetched once per core.
    # TODO(synk): single-buffer / stream per-layer weights for production
    #             channel counts (v7x 64 MiB VMEM budget).
    in_specs = [pl.BlockSpec(memory_space=pl.ANY)]
    for w in param_vals:
        in_specs.append(
            pl.BlockSpec(w.shape, lambda b, k, _nd=w.ndim: (0,) * _nd))
    out_spec = pl.BlockSpec((pl.Squeezed(), Cin, tt), lambda b, k: (b, 0, k))

    out_padded = pl.pallas_call(
        kernel,
        out_shape=jax.ShapeDtypeStruct((B, Cin, t_out_p), jnp.float32),
        grid=(B, n_t),
        in_specs=in_specs,
        out_specs=out_spec,
        scratch_shapes=[pltpu.VMEM((1, Cin, window), jnp.float32),
                        pltpu.SemaphoreType.DMA],
        compiler_params=pltpu.CompilerParams(
            dimension_semantics=("parallel", "parallel"),
            vmem_limit_bytes=_vmem_limit_bytes()),
    )(x, *param_vals)

    # remove_last + drop the right-pad garbage columns.
    return out_padded[:, :, :t_out]


# ---------------------------------------------------------------------------
# Pure-JAX reference (original shrinking-length formulation).  Matmul operands
# are cast to bf16 to mirror the kernel's MXU precision; gate and softmax are
# exact, so the only remaining deltas are the kernel's approx reciprocals.
# ---------------------------------------------------------------------------
def wavenet_reference(audio_ncl, params, layer_size, stack_size):
    dil = wavenet_dilations(layer_size, stack_size)
    rf = receptive_fields(layer_size, stack_size)
    B, Cin, T = audio_ncl.shape
    skip_size = T - rf + 1
    R = params["wdil0"].shape[1]
    S = params["wd1"].shape[0]
    x = audio_ncl.astype(jnp.float32)

    def mm(W, a):
        return jnp.einsum("oi,bit->bot", W.astype(jnp.bfloat16),
                          a.astype(jnp.bfloat16),
                          preferred_element_type=jnp.float32)

    x_prev = jnp.concatenate(
        [jnp.zeros((B, Cin, 1), x.dtype), x[:, :, :-1]], axis=2)
    h = mm(params["wc0"], x_prev) + mm(params["wc1"], x)

    skip_sum = jnp.zeros((B, S, skip_size), jnp.float32)
    for i, d in enumerate(dil):
        t_new = h.shape[-1] - d
        pre = (mm(params["wdil0"][i], h[:, :, :t_new])
               + mm(params["wdil1"][i], h[:, :, d:]))
        gated = jnp.tanh(pre) * jax.nn.sigmoid(pre)
        rs = mm(params["wrs"][i], gated) + params["brs"][i]
        h = rs[:, :R] + h[:, :, d:]
        skip_sum = skip_sum + rs[:, R:, t_new - skip_size:]

    y = jax.nn.relu(skip_sum)
    y = mm(params["wd1"], y) + params["bd1"]
    y = jax.nn.relu(y)
    y = mm(params["wd2"], y) + params["bd2"]
    y = y[:, :, : skip_size - 1]
    return jax.nn.softmax(y, axis=1)


if __name__ == "__main__":
    layer_size, stack_size = 3, 2
    input_channels, residual_channels, skip_channels = 4, 16, 16
    n_blocks = layer_size * stack_size

    key = jax.random.PRNGKey(0)
    k_a1, k_a2, k_params = jax.random.split(key, 3)
    params = init_params(k_params, input_channels, residual_channels,
                         skip_channels, n_blocks)
    rf = receptive_fields(layer_size, stack_size)

    # Test 1: single time tile, batch 2 (rf = 16 -> output length 112).
    B1, T1 = 2, 128
    audio1 = jax.random.normal(k_a1, (B1, input_channels, T1), jnp.float32)
    out1 = jax.block_until_ready(
        wavenet_forward(audio1, params, layer_size, stack_size, time_tile=128))
    ref1 = wavenet_reference(audio1, params, layer_size, stack_size)
    np.testing.assert_allclose(np.asarray(out1), np.asarray(ref1),
                               rtol=2e-2, atol=2e-2)
    assert out1.shape == (B1, input_channels, T1 - rf)

    # Test 2: multiple time tiles with halo recompute, batch 1.
    B2, T2 = 1, 400                      # output length 384 -> 2 tiles of 256
    audio2 = jax.random.normal(k_a2, (B2, input_channels, T2), jnp.float32)
    out2 = jax.block_until_ready(
        wavenet_forward(audio2, params, layer_size, stack_size, time_tile=256))
    ref2 = wavenet_reference(audio2, params, layer_size, stack_size)
    np.testing.assert_allclose(np.asarray(out2), np.asarray(ref2),
                               rtol=2e-2, atol=2e-2)
    assert out2.shape == (B2, input_channels, T2 - rf)

    print("KERNEL_OK")
</pallas_src>

<mosaic_0001>
module attributes {stable_mosaic.version = 11 : i64} {
  func.func @wavenet_kernel(%arg0: i32, %arg1: i32, %arg2: memref<2x4x256xf32, #tpu.memory_space<any>>, %arg3: memref<16x4xbf16, #tpu.memory_space<vmem>>, %arg4: memref<16x4xbf16, #tpu.memory_space<vmem>>, %arg5: memref<6x16x16xbf16, #tpu.memory_space<vmem>>, %arg6: memref<6x16x16xbf16, #tpu.memory_space<vmem>>, %arg7: memref<6x32x16xbf16, #tpu.memory_space<vmem>>, %arg8: memref<6x32x1xf32, #tpu.memory_space<vmem>>, %arg9: memref<16x16xbf16, #tpu.memory_space<vmem>>, %arg10: memref<16x1xf32, #tpu.memory_space<vmem>>, %arg11: memref<4x16xbf16, #tpu.memory_space<vmem>>, %arg12: memref<4x1xf32, #tpu.memory_space<vmem>>, %arg13: memref<1x4x128xf32, #tpu.memory_space<vmem>>, %arg14: memref<1x4x256xf32, #tpu.memory_space<vmem>>, %arg15: memref<!tpu.dma_semaphore, #tpu.memory_space<semaphore_mem>>) attributes {dimension_semantics = [#tpu.dimension_semantics<parallel>, #tpu.dimension_semantics<parallel>], iteration_bounds = array<i64: 2, 1>, scalar_prefetch = 0 : i64, scratch_operands = 2 : i64, tpu.core_type = #tpu.core_type<tc>, window_params = [{}, {pipeline_mode = #tpu.pipeline_mode<synchronous>, transform_indices = @transform_1, window_bounds = array<i64: 16, 4>}, {pipeline_mode = #tpu.pipeline_mode<synchronous>, transform_indices = @transform_2, window_bounds = array<i64: 16, 4>}, {pipeline_mode = #tpu.pipeline_mode<synchronous>, transform_indices = @transform_3, window_bounds = array<i64: 6, 16, 16>}, {pipeline_mode = #tpu.pipeline_mode<synchronous>, transform_indices = @transform_4, window_bounds = array<i64: 6, 16, 16>}, {pipeline_mode = #tpu.pipeline_mode<synchronous>, transform_indices = @transform_5, window_bounds = array<i64: 6, 32, 16>}, {pipeline_mode = #tpu.pipeline_mode<synchronous>, transform_indices = @transform_6, window_bounds = array<i64: 6, 32, 1>}, {pipeline_mode = #tpu.pipeline_mode<synchronous>, transform_indices = @transform_7, window_bounds = array<i64: 16, 16>}, {pipeline_mode = #tpu.pipeline_mode<synchronous>, transform_indices = @transform_8, window_bounds = array<i64: 16, 1>}, {pipeline_mode = #tpu.pipeline_mode<synchronous>, transform_indices = @transform_9, window_bounds = array<i64: 4, 16>}, {pipeline_mode = #tpu.pipeline_mode<synchronous>, transform_indices = @transform_10, window_bounds = array<i64: 4, 1>}, {transform_indices = @transform_11, window_bounds = array<i64: 1, 4, 128>}]} {
    %c128_i32 = arith.constant 128 : i32
    %0 = arith.muli %arg1, %c128_i32 : i32
    %1 = tpu.assume_multiple %0, 128 : i32
    %c0_i32 = arith.constant 0 : i32
    %2 = tpu.memref_slice %arg2[%arg0, %c0_i32, %1] : memref<2x4x256xf32, #tpu.memory_space<any>> -> memref<1x4x256xf32, #tpu.memory_space<any>>
    tpu.enqueue_dma source(%2 : memref<1x4x256xf32, #tpu.memory_space<any>>) target(%arg14 : memref<1x4x256xf32, #tpu.memory_space<vmem>>) target_semaphore(%arg15 : memref<!tpu.dma_semaphore, #tpu.memory_space<semaphore_mem>>)
    %c0_i32_0 = arith.constant 0 : i32
    %3 = tpu.memref_slice %arg2[%arg0, %c0_i32_0, %1] : memref<2x4x256xf32, #tpu.memory_space<any>> -> memref<1x4x256xf32, #tpu.memory_space<any>>
    tpu.wait_dma2 semaphore(%arg15 : memref<!tpu.dma_semaphore, #tpu.memory_space<semaphore_mem>>) src(%3 : memref<1x4x256xf32, #tpu.memory_space<any>>) dst(%arg14 : memref<1x4x256xf32, #tpu.memory_space<vmem>>)
    %c0 = arith.constant 0 : index
    %c0_1 = arith.constant 0 : index
    %c0_2 = arith.constant 0 : index
    %4 = vector.load %arg14[%c0, %c0_1, %c0_2] : memref<1x4x256xf32, #tpu.memory_space<vmem>>, vector<1x4x256xf32>
    %5 = vector.shape_cast %4 : vector<1x4x256xf32> to vector<4x256xf32>
    %c1_i32 = arith.constant 1 : i32
    %6 = tpu.dynamic_rotate %5 by %c1_i32 dim 1 : vector<4x256xf32>, i32 -> vector<4x256xf32>
    %7 = arith.truncf %6 : vector<4x256xf32> to vector<4x256xbf16>
    %c0_3 = arith.constant 0 : index
    %c0_4 = arith.constant 0 : index
    %8 = vector.load %arg3[%c0_3, %c0_4] : memref<16x4xbf16, #tpu.memory_space<vmem>>, vector<16x4xbf16>
    %cst = arith.constant dense<0.000000e+00> : vector<16x256xf32>
    %9 = tpu.matmul %8, %7, %cst {dimension_numbers = #tpu.dot_dimension_numbers<[1], [0], [0], [1], [0, 0, 1, 1], [], []>} : vector<16x4xbf16>, vector<4x256xbf16>, vector<16x256xf32> -> vector<16x256xf32>
    %c0_5 = arith.constant 0 : index
    %c0_6 = arith.constant 0 : index
    %10 = vector.load %arg4[%c0_5, %c0_6] : memref<16x4xbf16, #tpu.memory_space<vmem>>, vector<16x4xbf16>
    %11 = arith.truncf %5 : vector<4x256xf32> to vector<4x256xbf16>
    %cst_7 = arith.constant dense<0.000000e+00> : vector<16x256xf32>
    %12 = tpu.matmul %10, %11, %cst_7 {dimension_numbers = #tpu.dot_dimension_numbers<[1], [0], [0], [1], [0, 0, 1, 1], [], []>} : vector<16x4xbf16>, vector<4x256xbf16>, vector<16x256xf32> -> vector<16x256xf32>
    %13 = arith.addf %9, %12 : vector<16x256xf32>
    %cst_8 = arith.constant 0.000000e+00 : f32
    %14 = vector.broadcast %cst_8 : f32 to vector<16x128xf32>
    %c0_i32_9 = arith.constant 0 : i32
    %c2_i32 = arith.constant 2 : i32
    %15 = arith.addi %c0_i32_9, %c2_i32 : i32
    %c1_i32_10 = arith.constant 1 : i32
    %16:2 = scf.for %arg16 = %c0_i32_9 to %15 step %c1_i32_10 iter_args(%arg17 = %13, %arg18 = %14) -> (vector<16x256xf32>, vector<16x128xf32>)  : i32 {
      %c3_i32 = arith.constant 3 : i32
      %46 = arith.muli %arg16, %c3_i32 : i32
      %c0_i32_29 = arith.constant 0 : i32
      %47 = arith.addi %46, %c0_i32_29 : i32
      %48 = arith.truncf %arg17 : vector<16x256xf32> to vector<16x256xbf16>
      %c1_i32_30 = arith.constant 1 : i32
      %49 = tpu.dynamic_rotate %arg17 by %c1_i32_30 dim 1 : vector<16x256xf32>, i32 -> vector<16x256xf32>
      %50 = arith.truncf %49 : vector<16x256xf32> to vector<16x256xbf16>
      %51 = arith.index_cast %47 : i32 to index
      %c0_31 = arith.constant 0 : index
      %c0_32 = arith.constant 0 : index
      %52 = vector.load %arg5[%51, %c0_31, %c0_32] : memref<6x16x16xbf16, #tpu.memory_space<vmem>>, vector<1x16x16xbf16>
      %53 = vector.shape_cast %52 : vector<1x16x16xbf16> to vector<16x16xbf16>
      %cst_33 = arith.constant dense<0.000000e+00> : vector<16x256xf32>
      %54 = tpu.matmul %53, %50, %cst_33 {dimension_numbers = #tpu.dot_dimension_numbers<[1], [0], [0], [1], [0, 0, 1, 1], [], []>} : vector<16x16xbf16>, vector<16x256xbf16>, vector<16x256xf32> -> vector<16x256xf32>
      %55 = arith.index_cast %47 : i32 to index
      %c0_34 = arith.constant 0 : index
      %c0_35 = arith.constant 0 : index
      %56 = vector.load %arg6[%55, %c0_34, %c0_35] : memref<6x16x16xbf16, #tpu.memory_space<vmem>>, vector<1x16x16xbf16>
      %57 = vector.shape_cast %56 : vector<1x16x16xbf16> to vector<16x16xbf16>
      %cst_36 = arith.constant dense<0.000000e+00> : vector<16x256xf32>
      %58 = tpu.matmul %57, %48, %cst_36 {dimension_numbers = #tpu.dot_dimension_numbers<[1], [0], [0], [1], [0, 0, 1, 1], [], []>} : vector<16x16xbf16>, vector<16x256xbf16>, vector<16x256xf32> -> vector<16x256xf32>
      %59 = arith.addf %54, %58 : vector<16x256xf32>
      %cst_37 = arith.constant -3.000000e+01 : f32
      %cst_38 = arith.constant 3.000000e+01 : f32
      %60 = vector.broadcast %cst_37 : f32 to vector<16x256xf32>
      %61 = arith.maximumf %60, %59 : vector<16x256xf32>
      %62 = vector.broadcast %cst_38 : f32 to vector<16x256xf32>
      %63 = arith.minimumf %62, %61 : vector<16x256xf32>
      %64 = math.exp %63 : vector<16x256xf32>
      %65 = arith.mulf %64, %64 : vector<16x256xf32>
      %66 = arith.subf %65, %64 : vector<16x256xf32>
      %cst_39 = arith.constant 1.000000e+00 : f32
      %67 = vector.broadcast %cst_39 : f32 to vector<16x256xf32>
      %68 = arith.addf %65, %67 : vector<16x256xf32>
      %69 = tpu.reciprocal %68 {approx = true} : vector<16x256xf32> -> vector<16x256xf32>
      %70 = arith.mulf %66, %69 : vector<16x256xf32>
      %71 = arith.index_cast %47 : i32 to index
      %c0_40 = arith.constant 0 : index
      %c0_41 = arith.constant 0 : index
      %72 = vector.load %arg7[%71, %c0_40, %c0_41] : memref<6x32x16xbf16, #tpu.memory_space<vmem>>, vector<1x32x16xbf16>
      %73 = vector.shape_cast %72 : vector<1x32x16xbf16> to vector<32x16xbf16>
      %74 = arith.truncf %70 : vector<16x256xf32> to vector<16x256xbf16>
      %cst_42 = arith.constant dense<0.000000e+00> : vector<32x256xf32>
      %75 = tpu.matmul %73, %74, %cst_42 {dimension_numbers = #tpu.dot_dimension_numbers<[1], [0], [0], [1], [0, 0, 1, 1], [], []>} : vector<32x16xbf16>, vector<16x256xbf16>, vector<32x256xf32> -> vector<32x256xf32>
      %76 = arith.index_cast %47 : i32 to index
      %c0_43 = arith.constant 0 : index
      %c0_44 = arith.constant 0 : index
      %77 = vector.load %arg8[%76, %c0_43, %c0_44] : memref<6x32x1xf32, #tpu.memory_space<vmem>>, vector<1x32x1xf32>
      %78 = vector.shape_cast %77 : vector<1x32x1xf32> to vector<32x1xf32>
      %79 = vector.broadcast %78 : vector<32x1xf32> to vector<32x256xf32>
      %80 = arith.addf %75, %79 : vector<32x256xf32>
      %81 = vector.extract_strided_slice %80 {offsets = [0, 0], sizes = [16, 256], strides = [1, 1]} : vector<32x256xf32> to vector<16x256xf32>
      %82 = arith.addf %81, %arg17 : vector<16x256xf32>
      %83 = vector.extract_strided_slice %80 {offsets = [16, 128], sizes = [16, 128], strides = [1, 1]} : vector<32x256xf32> to vector<16x128xf32>
      %84 = arith.addf %arg18, %83 : vector<16x128xf32>
      %c3_i32_45 = arith.constant 3 : i32
      %85 = arith.muli %arg16, %c3_i32_45 : i32
      %c1_i32_46 = arith.constant 1 : i32
      %86 = arith.addi %85, %c1_i32_46 : i32
      %87 = arith.truncf %82 : vector<16x256xf32> to vector<16x256xbf16>
      %c2_i32_47 = arith.constant 2 : i32
      %88 = tpu.dynamic_rotate %82 by %c2_i32_47 dim 1 : vector<16x256xf32>, i32 -> vector<16x256xf32>
      %89 = arith.truncf %88 : vector<16x256xf32> to vector<16x256xbf16>
      %90 = arith.index_cast %86 : i32 to index
      %c0_48 = arith.constant 0 : index
      %c0_49 = arith.constant 0 : index
      %91 = vector.load %arg5[%90, %c0_48, %c0_49] : memref<6x16x16xbf16, #tpu.memory_space<vmem>>, vector<1x16x16xbf16>
      %92 = vector.shape_cast %91 : vector<1x16x16xbf16> to vector<16x16xbf16>
      %cst_50 = arith.constant dense<0.000000e+00> : vector<16x256xf32>
      %93 = tpu.matmul %92, %89, %cst_50 {dimension_numbers = #tpu.dot_dimension_numbers<[1], [0], [0], [1], [0, 0, 1, 1], [], []>} : vector<16x16xbf16>, vector<16x256xbf16>, vector<16x256xf32> -> vector<16x256xf32>
      %94 = arith.index_cast %86 : i32 to index
      %c0_51 = arith.constant 0 : index
      %c0_52 = arith.constant 0 : index
      %95 = vector.load %arg6[%94, %c0_51, %c0_52] : memref<6x16x16xbf16, #tpu.memory_space<vmem>>, vector<1x16x16xbf16>
      %96 = vector.shape_cast %95 : vector<1x16x16xbf16> to vector<16x16xbf16>
      %cst_53 = arith.constant dense<0.000000e+00> : vector<16x256xf32>
      %97 = tpu.matmul %96, %87, %cst_53 {dimension_numbers = #tpu.dot_dimension_numbers<[1], [0], [0], [1], [0, 0, 1, 1], [], []>} : vector<16x16xbf16>, vector<16x256xbf16>, vector<16x256xf32> -> vector<16x256xf32>
      %98 = arith.addf %93, %97 : vector<16x256xf32>
      %cst_54 = arith.constant -3.000000e+01 : f32
      %cst_55 = arith.constant 3.000000e+01 : f32
      %99 = vector.broadcast %cst_54 : f32 to vector<16x256xf32>
      %100 = arith.maximumf %99, %98 : vector<16x256xf32>
      %101 = vector.broadcast %cst_55 : f32 to vector<16x256xf32>
      %102 = arith.minimumf %101, %100 : vector<16x256xf32>
      %103 = math.exp %102 : vector<16x256xf32>
      %104 = arith.mulf %103, %103 : vector<16x256xf32>
      %105 = arith.subf %104, %103 : vector<16x256xf32>
      %cst_56 = arith.constant 1.000000e+00 : f32
      %106 = vector.broadcast %cst_56 : f32 to vector<16x256xf32>
      %107 = arith.addf %104, %106 : vector<16x256xf32>
      %108 = tpu.reciprocal %107 {approx = true} : vector<16x256xf32> -> vector<16x256xf32>
      %109 = arith.mulf %105, %108 : vector<16x256xf32>
      %110 = arith.index_cast %86 : i32 to index
      %c0_57 = arith.constant 0 : index
      %c0_58 = arith.constant 0 : index
      %111 = vector.load %arg7[%110, %c0_57, %c0_58] : memref<6x32x16xbf16, #tpu.memory_space<vmem>>, vector<1x32x16xbf16>
      %112 = vector.shape_cast %111 : vector<1x32x16xbf16> to vector<32x16xbf16>
      %113 = arith.truncf %109 : vector<16x256xf32> to vector<16x256xbf16>
      %cst_59 = arith.constant dense<0.000000e+00> : vector<32x256xf32>
      %114 = tpu.matmul %112, %113, %cst_59 {dimension_numbers = #tpu.dot_dimension_numbers<[1], [0], [0], [1], [0, 0, 1, 1], [], []>} : vector<32x16xbf16>, vector<16x256xbf16>, vector<32x256xf32> -> vector<32x256xf32>
      %115 = arith.index_cast %86 : i32 to index
      %c0_60 = arith.constant 0 : index
      %c0_61 = arith.constant 0 : index
      %116 = vector.load %arg8[%115, %c0_60, %c0_61] : memref<6x32x1xf32, #tpu.memory_space<vmem>>, vector<1x32x1xf32>
      %117 = vector.shape_cast %116 : vector<1x32x1xf32> to vector<32x1xf32>
      %118 = vector.broadcast %117 : vector<32x1xf32> to vector<32x256xf32>
      %119 = arith.addf %114, %118 : vector<32x256xf32>
      %120 = vector.extract_strided_slice %119 {offsets = [0, 0], sizes = [16, 256], strides = [1, 1]} : vector<32x256xf32> to vector<16x256xf32>
      %121 = arith.addf %120, %82 : vector<16x256xf32>
      %122 = vector.extract_strided_slice %119 {offsets = [16, 128], sizes = [16, 128], strides = [1, 1]} : vector<32x256xf32> to vector<16x128xf32>
      %123 = arith.addf %84, %122 : vector<16x128xf32>
      %c3_i32_62 = arith.constant 3 : i32
      %124 = arith.muli %arg16, %c3_i32_62 : i32
      %c2_i32_63 = arith.constant 2 : i32
      %125 = arith.addi %124, %c2_i32_63 : i32
      %126 = arith.truncf %121 : vector<16x256xf32> to vector<16x256xbf16>
      %c4_i32 = arith.constant 4 : i32
      %127 = tpu.dynamic_rotate %121 by %c4_i32 dim 1 : vector<16x256xf32>, i32 -> vector<16x256xf32>
      %128 = arith.truncf %127 : vector<16x256xf32> to vector<16x256xbf16>
      %129 = arith.index_cast %125 : i32 to index
      %c0_64 = arith.constant 0 : index
      %c0_65 = arith.constant 0 : index
      %130 = vector.load %arg5[%129, %c0_64, %c0_65] : memref<6x16x16xbf16, #tpu.memory_space<vmem>>, vector<1x16x16xbf16>
      %131 = vector.shape_cast %130 : vector<1x16x16xbf16> to vector<16x16xbf16>
      %cst_66 = arith.constant dense<0.000000e+00> : vector<16x256xf32>
      %132 = tpu.matmul %131, %128, %cst_66 {dimension_numbers = #tpu.dot_dimension_numbers<[1], [0], [0], [1], [0, 0, 1, 1], [], []>} : vector<16x16xbf16>, vector<16x256xbf16>, vector<16x256xf32> -> vector<16x256xf32>
      %133 = arith.index_cast %125 : i32 to index
      %c0_67 = arith.constant 0 : index
      %c0_68 = arith.constant 0 : index
      %134 = vector.load %arg6[%133, %c0_67, %c0_68] : memref<6x16x16xbf16, #tpu.memory_space<vmem>>, vector<1x16x16xbf16>
      %135 = vector.shape_cast %134 : vector<1x16x16xbf16> to vector<16x16xbf16>
      %cst_69 = arith.constant dense<0.000000e+00> : vector<16x256xf32>
      %136 = tpu.matmul %135, %126, %cst_69 {dimension_numbers = #tpu.dot_dimension_numbers<[1], [0], [0], [1], [0, 0, 1, 1], [], []>} : vector<16x16xbf16>, vector<16x256xbf16>, vector<16x256xf32> -> vector<16x256xf32>
      %137 = arith.addf %132, %136 : vector<16x256xf32>
      %cst_70 = arith.constant -3.000000e+01 : f32
      %cst_71 = arith.constant 3.000000e+01 : f32
      %138 = vector.broadcast %cst_70 : f32 to vector<16x256xf32>
      %139 = arith.maximumf %138, %137 : vector<16x256xf32>
      %140 = vector.broadcast %cst_71 : f32 to vector<16x256xf32>
      %141 = arith.minimumf %140, %139 : vector<16x256xf32>
      %142 = math.exp %141 : vector<16x256xf32>
      %143 = arith.mulf %142, %142 : vector<16x256xf32>
      %144 = arith.subf %143, %142 : vector<16x256xf32>
      %cst_72 = arith.constant 1.000000e+00 : f32
      %145 = vector.broadcast %cst_72 : f32 to vector<16x256xf32>
      %146 = arith.addf %143, %145 : vector<16x256xf32>
      %147 = tpu.reciprocal %146 {approx = true} : vector<16x256xf32> -> vector<16x256xf32>
      %148 = arith.mulf %144, %147 : vector<16x256xf32>
      %149 = arith.index_cast %125 : i32 to index
      %c0_73 = arith.constant 0 : index
      %c0_74 = arith.constant 0 : index
      %150 = vector.load %arg7[%149, %c0_73, %c0_74] : memref<6x32x16xbf16, #tpu.memory_space<vmem>>, vector<1x32x16xbf16>
      %151 = vector.shape_cast %150 : vector<1x32x16xbf16> to vector<32x16xbf16>
      %152 = arith.truncf %148 : vector<16x256xf32> to vector<16x256xbf16>
      %cst_75 = arith.constant dense<0.000000e+00> : vector<32x256xf32>
      %153 = tpu.matmul %151, %152, %cst_75 {dimension_numbers = #tpu.dot_dimension_numbers<[1], [0], [0], [1], [0, 0, 1, 1], [], []>} : vector<32x16xbf16>, vector<16x256xbf16>, vector<32x256xf32> -> vector<32x256xf32>
      %154 = arith.index_cast %125 : i32 to index
      %c0_76 = arith.constant 0 : index
      %c0_77 = arith.constant 0 : index
      %155 = vector.load %arg8[%154, %c0_76, %c0_77] : memref<6x32x1xf32, #tpu.memory_space<vmem>>, vector<1x32x1xf32>
      %156 = vector.shape_cast %155 : vector<1x32x1xf32> to vector<32x1xf32>
      %157 = vector.broadcast %156 : vector<32x1xf32> to vector<32x256xf32>
      %158 = arith.addf %153, %157 : vector<32x256xf32>
      %159 = vector.extract_strided_slice %158 {offsets = [0, 0], sizes = [16, 256], strides = [1, 1]} : vector<32x256xf32> to vector<16x256xf32>
      %160 = arith.addf %159, %121 : vector<16x256xf32>
      %161 = vector.extract_strided_slice %158 {offsets = [16, 128], sizes = [16, 128], strides = [1, 1]} : vector<32x256xf32> to vector<16x128xf32>
      %162 = arith.addf %123, %161 : vector<16x128xf32>
      scf.yield %160, %162 : vector<16x256xf32>, vector<16x128xf32>
    }
    %c2_i32_11 = arith.constant 2 : i32
    %cst_12 = arith.constant 0.000000e+00 : f32
    %17 = vector.broadcast %cst_12 : f32 to vector<16x128xf32>
    %18 = arith.maximumf %16#1, %17 : vector<16x128xf32>
    %c0_13 = arith.constant 0 : index
    %c0_14 = arith.constant 0 : index
    %19 = vector.load %arg9[%c0_13, %c0_14] : memref<16x16xbf16, #tpu.memory_space<vmem>>, vector<16x16xbf16>
    %20 = arith.truncf %18 : vector<16x128xf32> to vector<16x128xbf16>
    %cst_15 = arith.constant dense<0.000000e+00> : vector<16x128xf32>
    %21 = tpu.matmul %19, %20, %cst_15 {dimension_numbers = #tpu.dot_dimension_numbers<[1], [0], [0], [1], [0, 0, 1, 1], [], []>} : vector<16x16xbf16>, vector<16x128xbf16>, vector<16x128xf32> -> vector<16x128xf32>
    %c0_16 = arith.constant 0 : index
    %c0_17 = arith.constant 0 : index
    %22 = vector.load %arg10[%c0_16, %c0_17] : memref<16x1xf32, #tpu.memory_space<vmem>>, vector<16x1xf32>
    %23 = vector.broadcast %22 : vector<16x1xf32> to vector<16x128xf32>
    %24 = arith.addf %21, %23 : vector<16x128xf32>
    %cst_18 = arith.constant 0.000000e+00 : f32
    %25 = vector.broadcast %cst_18 : f32 to vector<16x128xf32>
    %26 = arith.maximumf %24, %25 : vector<16x128xf32>
    %c0_19 = arith.constant 0 : index
    %c0_20 = arith.constant 0 : index
    %27 = vector.load %arg11[%c0_19, %c0_20] : memref<4x16xbf16, #tpu.memory_space<vmem>>, vector<4x16xbf16>
    %28 = arith.truncf %26 : vector<16x128xf32> to vector<16x128xbf16>
    %cst_21 = arith.constant dense<0.000000e+00> : vector<4x128xf32>
    %29 = tpu.matmul %27, %28, %cst_21 {dimension_numbers = #tpu.dot_dimension_numbers<[1], [0], [0], [1], [0, 0, 1, 1], [], []>} : vector<4x16xbf16>, vector<16x128xbf16>, vector<4x128xf32> -> vector<4x128xf32>
    %c0_22 = arith.constant 0 : index
    %c0_23 = arith.constant 0 : index
    %30 = vector.load %arg12[%c0_22, %c0_23] : memref<4x1xf32, #tpu.memory_space<vmem>>, vector<4x1xf32>
    %31 = vector.broadcast %30 : vector<4x1xf32> to vector<4x128xf32>
    %32 = arith.addf %29, %31 : vector<4x128xf32>
    %cst_24 = arith.constant dense<0xFF800000> : vector<128xf32>
    %33 = vector.multi_reduction <maximumf>, %32, %cst_24 [0] : vector<4x128xf32> to vector<128xf32>
    %34 = vector.shape_cast %33 : vector<128xf32> to vector<1x128xf32>
    %35 = vector.broadcast %34 : vector<1x128xf32> to vector<4x128xf32>
    %36 = arith.subf %32, %35 : vector<4x128xf32>
    %37 = math.exp %36 : vector<4x128xf32>
    %cst_25 = arith.constant dense<0.000000e+00> : vector<128xf32>
    %38 = vector.multi_reduction <add>, %37, %cst_25 [0] : vector<4x128xf32> to vector<128xf32>
    %39 = vector.shape_cast %38 : vector<128xf32> to vector<1x128xf32>
    %40 = tpu.reciprocal %39 {approx = true} : vector<1x128xf32> -> vector<1x128xf32>
    %41 = vector.broadcast %40 : vector<1x128xf32> to vector<4x128xf32>
    %42 = arith.mulf %37, %41 : vector<4x128xf32>
    %c0_26 = arith.constant 0 : index
    %c0_27 = arith.constant 0 : index
    %c0_28 = arith.constant 0 : index
    %43 = vector.load %arg13[%c0_26, %c0_27, %c0_28] : memref<1x4x128xf32, #tpu.memory_space<vmem>>, vector<1x4x128xf32>
    %44 = vector.shape_cast %43 : vector<1x4x128xf32> to vector<4x128xf32>
    %45 = vector.shape_cast %42 : vector<4x128xf32> to vector<1x4x128xf32>
    tpu.vector_store %arg13[%c0_26, %c0_27, %c0_28], %45 {strides = array<i32>} : memref<1x4x128xf32, #tpu.memory_space<vmem>>, vector<1x4x128xf32>,
    return
  }
  func.func @transform_1(%arg0: i32, %arg1: i32) -> (i32, i32) {
    %c0_i32 = arith.constant 0 : i32
    %c0_i32_0 = arith.constant 0 : i32
    %c0_i32_1 = arith.constant 0 : i32
    return %c0_i32, %c0_i32_0 : i32, i32
  }
  func.func @transform_2(%arg0: i32, %arg1: i32) -> (i32, i32) {
    %c0_i32 = arith.constant 0 : i32
    %c0_i32_0 = arith.constant 0 : i32
    %c0_i32_1 = arith.constant 0 : i32
    return %c0_i32, %c0_i32_0 : i32, i32
  }
  func.func @transform_3(%arg0: i32, %arg1: i32) -> (i32, i32, i32) {
    %c0_i32 = arith.constant 0 : i32
    %c0_i32_0 = arith.constant 0 : i32
    %c0_i32_1 = arith.constant 0 : i32
    %c0_i32_2 = arith.constant 0 : i32
    return %c0_i32, %c0_i32_0, %c0_i32_1 : i32, i32, i32
  }
  func.func @transform_4(%arg0: i32, %arg1: i32) -> (i32, i32, i32) {
    %c0_i32 = arith.constant 0 : i32
    %c0_i32_0 = arith.constant 0 : i32
    %c0_i32_1 = arith.constant 0 : i32
    %c0_i32_2 = arith.constant 0 : i32
    return %c0_i32, %c0_i32_0, %c0_i32_1 : i32, i32, i32
  }
  func.func @transform_5(%arg0: i32, %arg1: i32) -> (i32, i32, i32) {
    %c0_i32 = arith.constant 0 : i32
    %c0_i32_0 = arith.constant 0 : i32
    %c0_i32_1 = arith.constant 0 : i32
    %c0_i32_2 = arith.constant 0 : i32
    return %c0_i32, %c0_i32_0, %c0_i32_1 : i32, i32, i32
  }
  func.func @transform_6(%arg0: i32, %arg1: i32) -> (i32, i32, i32) {
    %c0_i32 = arith.constant 0 : i32
    %c0_i32_0 = arith.constant 0 : i32
    %c0_i32_1 = arith.constant 0 : i32
    %c0_i32_2 = arith.constant 0 : i32
    return %c0_i32, %c0_i32_0, %c0_i32_1 : i32, i32, i32
  }
  func.func @transform_7(%arg0: i32, %arg1: i32) -> (i32, i32) {
    %c0_i32 = arith.constant 0 : i32
    %c0_i32_0 = arith.constant 0 : i32
    %c0_i32_1 = arith.constant 0 : i32
    return %c0_i32, %c0_i32_0 : i32, i32
  }
  func.func @transform_8(%arg0: i32, %arg1: i32) -> (i32, i32) {
    %c0_i32 = arith.constant 0 : i32
    %c0_i32_0 = arith.constant 0 : i32
    %c0_i32_1 = arith.constant 0 : i32
    return %c0_i32, %c0_i32_0 : i32, i32
  }
  func.func @transform_9(%arg0: i32, %arg1: i32) -> (i32, i32) {
    %c0_i32 = arith.constant 0 : i32
    %c0_i32_0 = arith.constant 0 : i32
    %c0_i32_1 = arith.constant 0 : i32
    return %c0_i32, %c0_i32_0 : i32, i32
  }
  func.func @transform_10(%arg0: i32, %arg1: i32) -> (i32, i32) {
    %c0_i32 = arith.constant 0 : i32
    %c0_i32_0 = arith.constant 0 : i32
    %c0_i32_1 = arith.constant 0 : i32
    return %c0_i32, %c0_i32_0 : i32, i32
  }
  func.func @transform_11(%arg0: i32, %arg1: i32) -> (i32, i32, i32) {
    %c0_i32 = arith.constant 0 : i32
    %c0_i32_0 = arith.constant 0 : i32
    return %arg0, %c0_i32, %arg1 : i32, i32, i32
  }
}

</mosaic_0001>

<llo_original>
// kernel: tpu_custom_call.1
$region0: #{tpu_custom_call.1}
  #allocation0 [shape = 'u32[]', space=smem, size = 0x4, offset = 0x4, fixed_abs, tag = 'smem constant byte address 0x4 - core index']
  #allocation1 [shape = 'u32[144,128]{1,0:T(1,128)}', space=vmem, size = 0x12000, scoped, tag = 'internal scratch']
  #allocation2 [shape = 'f32[1,4,256]{2,1,0:T(4,128)}', space=vmem, size = 0x1000, scoped, tag = 'scratch operand']
  #allocation3 [shape = 's32[1]{0}', space=sflag, size = 0x4, scoped, tag = 'scratch operand']
  #allocation6 [shape = 's32[]', space=sflag, size = 0x4, offset = 0, fixed_abs, tag = 'sflag constant byte address 0x0 - dummy sync flag']
  %s0 = inlined_call_operand.vmem [shape: f32[2,4,256], index: 0, kind: input, shape index: {}]
  %s1 = inlined_call_operand.vmem [shape: bf16[16,4], index: 1, kind: input, shape index: {}]
  %s2 = inlined_call_operand.vmem [shape: bf16[16,4], index: 2, kind: input, shape index: {}]
  %s3 = inlined_call_operand.vmem [shape: bf16[6,16,16], index: 3, kind: input, shape index: {}]
  %s4 = inlined_call_operand.vmem [shape: bf16[6,16,16], index: 4, kind: input, shape index: {}]
  %s5 = inlined_call_operand.vmem [shape: bf16[6,32,16], index: 5, kind: input, shape index: {}]
  %s6 = inlined_call_operand.vmem [shape: f32[6,32,1], index: 6, kind: input, shape index: {}]
  %s7 = inlined_call_operand.vmem [shape: bf16[16,16], index: 7, kind: input, shape index: {}]
  %s8 = inlined_call_operand.vmem [shape: f32[16,1], index: 8, kind: input, shape index: {}]
  %s9 = inlined_call_operand.vmem [shape: bf16[4,16], index: 9, kind: input, shape index: {}]
  %s10 = inlined_call_operand.vmem [shape: f32[4,1], index: 10, kind: input, shape index: {}]
  %s11 = inlined_call_operand.hbm [shape: f32[2,4,128], index: 11, kind: output, shape index: {}]
  %s12 = sld [smem:[#allocation0]]
  $region114: #{tpu_custom_call.1} parent=0
    _
  %s14 = ssub.s32 1, %s12
  %s15 = scalar_select 0, %s14, %s12
  $region1: #{tpu_custom_call.1} parent=0
    #allocation4 [shape = 'u8[4096]{0}', space=vmem, size = 0x1000, scoped, tag = 'output window, operand 0']
    #allocation5 [shape = 's32[2]{0}', space=sflag, size = 0x8, scoped, tag = 'scoped memory for tpu_custom_call.1']
    %16 = vsyncpa [#allocation5], 0
    %s17 = scalar_lea.sflag [#allocation5], 1
    %18 = vsyncpa %s17, 0
    loop: start=0, step=1, limit=4
    $region2: #{tpu_custom_call.1} parent=1 // loop_pre_header
      _
    $region3: #{tpu_custom_call.1} parent=1 // loop_header
      %s20 = sphi 0, %s24
      %p21 = scmp.ge.s32.totalorder %s20, 4
      %s27 = sphi 0, %s39
      %s28 = sphi 0, %s35
      %s29 = sphi 0, %s27
      %s30 = sphi 0, %s28
      %s31 = sphi 0, %s29
      %s32 = sphi 0, %s30
      %s40 = sphi 0, %s40
      %s42 = sphi 0, %s40
      %s43 = sphi 0, %s42
      %s57 = sphi 0, %s43
      %s61 = sphi 0, %s61
      %s63 = sphi 0, %s61
      %s64 = sphi 0, %s63
      %s78 = sphi 0, %s64
      %s82 = sphi 0, %s82
      %s84 = sphi 0, %s82
      %s85 = sphi 0, %s84
      %s99 = sphi 0, %s85
      %s103 = sphi 0, %s103
      %s105 = sphi 0, %s103
      %s106 = sphi 0, %s105
      %s120 = sphi 0, %s106
      %s124 = sphi 0, %s124
      %s126 = sphi 0, %s124
      %s127 = sphi 0, %s126
      %s141 = sphi 0, %s127
      %s145 = sphi 0, %s145
      %s147 = sphi 0, %s145
      %s148 = sphi 0, %s147
      %s162 = sphi 0, %s148
      %s166 = sphi 0, %s166
      %s168 = sphi 0, %s166
      %s169 = sphi 0, %s168
      %s183 = sphi 0, %s169
      %s187 = sphi 0, %s187
      %s189 = sphi 0, %s187
      %s190 = sphi 0, %s189
      %s204 = sphi 0, %s190
      %s208 = sphi 0, %s208
      %s210 = sphi 0, %s208
      %s211 = sphi 0, %s210
      %s225 = sphi 0, %s211
      %s229 = sphi 0, %s229
      %s231 = sphi 0, %s229
      %s232 = sphi 0, %s231
      %s246 = sphi 0, %s232
      %s254 = sphi 0, %s256
      %s257 = sphi 0, %s254
      %s258 = sphi 0, %s257
      %s274 = sphi 0, %s258
    $region4: #{tpu_custom_call.1} parent=1 // loop_header_branch
      %23 = sbr.rel (%p21) target = $region8
    $region5: #{tpu_custom_call.1} parent=1 // loop_body
      %s25 = ssub.s32 %s20, 1
      %s26 = ssub.s32 %s20, 2
      %s33 = sadd.s32 1, %s28
      %p34 = scmp.ge.s32.totalorder %s33, 1
      %s35 = scalar_select %p34, 0, %s33
      %s36 = sadd.s32 1, %s27
      %s37 = scalar_select %p34, %s36, %s27
      %p38 = scmp.ge.s32.totalorder %s37, 2
      %s39 = scalar_select %p38, 0, %s37
      %s41 = sadd.s32 %s40, 1
      %p44 = scmp.eq.s32.totalorder %s20, 1
      %p45 = scmp.ne.s32.totalorder %s40, %s42
      %p46 = scmp.eq.s32.totalorder %s20, 0
      %p47 = por %p45, %p46
      %p48 = scmp.ne.s32.totalorder %s40, %s42
      %p49 = scmp.eq.s32.totalorder %s25, 1
      %p50 = por %p48, %p49
      %p51 = scmp.ne.s32.totalorder %s42, %s43
      %p52 = scmp.eq.s32.totalorder %s25, 0
      %p53 = por %p51, %p52
      %p54 = scmp.ne.s32.totalorder %s42, %s43
      %p55 = scmp.eq.s32.totalorder %s26, 1
      %p56 = por %p54, %p55
      %p58 = scmp.ne.s32.totalorder %s43, %s57
      %p59 = scmp.eq.s32.totalorder %s26, 0
      %p60 = por %p58, %p59
      %s62 = sadd.s32 %s61, 1
      %p65 = scmp.eq.s32.totalorder %s20, 1
      %p66 = scmp.ne.s32.totalorder %s61, %s63
      %p67 = scmp.eq.s32.totalorder %s20, 0
      %p68 = por %p66, %p67
      %p69 = scmp.ne.s32.totalorder %s61, %s63
      %p70 = scmp.eq.s32.totalorder %s25, 1
      %p71 = por %p69, %p70
      %p72 = scmp.ne.s32.totalorder %s63, %s64
      %p73 = scmp.eq.s32.totalorder %s25, 0
      %p74 = por %p72, %p73
      %p75 = scmp.ne.s32.totalorder %s63, %s64
      %p76 = scmp.eq.s32.totalorder %s26, 1
      %p77 = por %p75, %p76
      %p79 = scmp.ne.s32.totalorder %s64, %s78
      %p80 = scmp.eq.s32.totalorder %s26, 0
      %p81 = por %p79, %p80
      %s83 = sadd.s32 %s82, 1
      %p86 = scmp.eq.s32.totalorder %s20, 1
      %p87 = scmp.ne.s32.totalorder %s82, %s84
      %p88 = scmp.eq.s32.totalorder %s20, 0
      %p89 = por %p87, %p88
      %p90 = scmp.ne.s32.totalorder %s82, %s84
      %p91 = scmp.eq.s32.totalorder %s25, 1
      %p92 = por %p90, %p91
      %p93 = scmp.ne.s32.totalorder %s84, %s85
      %p94 = scmp.eq.s32.totalorder %s25, 0
      %p95 = por %p93, %p94
      %p96 = scmp.ne.s32.totalorder %s84, %s85
      %p97 = scmp.eq.s32.totalorder %s26, 1
      %p98 = por %p96, %p97
      %p100 = scmp.ne.s32.totalorder %s85, %s99
      %p101 = scmp.eq.s32.totalorder %s26, 0
      %p102 = por %p100, %p101
      %s104 = sadd.s32 %s103, 1
      %p107 = scmp.eq.s32.totalorder %s20, 1
      %p108 = scmp.ne.s32.totalorder %s103, %s105
      %p109 = scmp.eq.s32.totalorder %s20, 0
      %p110 = por %p108, %p109
      %p111 = scmp.ne.s32.totalorder %s103, %s105
      %p112 = scmp.eq.s32.totalorder %s25, 1
      %p113 = por %p111, %p112
      %p114 = scmp.ne.s32.totalorder %s105, %s106
      %p115 = scmp.eq.s32.totalorder %s25, 0
      %p116 = por %p114, %p115
      %p117 = scmp.ne.s32.totalorder %s105, %s106
      %p118 = scmp.eq.s32.totalorder %s26, 1
      %p119 = por %p117, %p118
      %p121 = scmp.ne.s32.totalorder %s106, %s120
      %p122 = scmp.eq.s32.totalorder %s26, 0
      %p123 = por %p121, %p122
      %s125 = sadd.s32 %s124, 1
      %p128 = scmp.eq.s32.totalorder %s20, 1
      %p129 = scmp.ne.s32.totalorder %s124, %s126
      %p130 = scmp.eq.s32.totalorder %s20, 0
      %p131 = por %p129, %p130
      %p132 = scmp.ne.s32.totalorder %s124, %s126
      %p133 = scmp.eq.s32.totalorder %s25, 1
      %p134 = por %p132, %p133
      %p135 = scmp.ne.s32.totalorder %s126, %s127
      %p136 = scmp.eq.s32.totalorder %s25, 0
      %p137 = por %p135, %p136
      %p138 = scmp.ne.s32.totalorder %s126, %s127
      %p139 = scmp.eq.s32.totalorder %s26, 1
      %p140 = por %p138, %p139
      %p142 = scmp.ne.s32.totalorder %s127, %s141
      %p143 = scmp.eq.s32.totalorder %s26, 0
      %p144 = por %p142, %p143
      %s146 = sadd.s32 %s145, 1
      %p149 = scmp.eq.s32.totalorder %s20, 1
      %p150 = scmp.ne.s32.totalorder %s145, %s147
      %p151 = scmp.eq.s32.totalorder %s20, 0
      %p152 = por %p150, %p151
      %p153 = scmp.ne.s32.totalorder %s145, %s147
      %p154 = scmp.eq.s32.totalorder %s25, 1
      %p155 = por %p153, %p154
      %p156 = scmp.ne.s32.totalorder %s147, %s148
      %p157 = scmp.eq.s32.totalorder %s25, 0
      %p158 = por %p156, %p157
      %p159 = scmp.ne.s32.totalorder %s147, %s148
      %p160 = scmp.eq.s32.totalorder %s26, 1
      %p161 = por %p159, %p160
      %p163 = scmp.ne.s32.totalorder %s148, %s162
      %p164 = scmp.eq.s32.totalorder %s26, 0
      %p165 = por %p163, %p164
      %s167 = sadd.s32 %s166, 1
      %p170 = scmp.eq.s32.totalorder %s20, 1
      %p171 = scmp.ne.s32.totalorder %s166, %s168
      %p172 = scmp.eq.s32.totalorder %s20, 0
      %p173 = por %p171, %p172
      %p174 = scmp.ne.s32.totalorder %s166, %s168
      %p175 = scmp.eq.s32.totalorder %s25, 1
      %p176 = por %p174, %p175
      %p177 = scmp.ne.s32.totalorder %s168, %s169
      %p178 = scmp.eq.s32.totalorder %s25, 0
      %p179 = por %p177, %p178
      %p180 = scmp.ne.s32.totalorder %s168, %s169
      %p181 = scmp.eq.s32.totalorder %s26, 1
      %p182 = por %p180, %p181
      %p184 = scmp.ne.s32.totalorder %s169, %s183
      %p185 = scmp.eq.s32.totalorder %s26, 0
      %p186 = por %p184, %p185
      %s188 = sadd.s32 %s187, 1
      %p191 = scmp.eq.s32.totalorder %s20, 1
      %p192 = scmp.ne.s32.totalorder %s187, %s189
      %p193 = scmp.eq.s32.totalorder %s20, 0
      %p194 = por %p192, %p193
      %p195 = scmp.ne.s32.totalorder %s187, %s189
      %p196 = scmp.eq.s32.totalorder %s25, 1
      %p197 = por %p195, %p196
      %p198 = scmp.ne.s32.totalorder %s189, %s190
      %p199 = scmp.eq.s32.totalorder %s25, 0
      %p200 = por %p198, %p199
      %p201 = scmp.ne.s32.totalorder %s189, %s190
      %p202 = scmp.eq.s32.totalorder %s26, 1
      %p203 = por %p201, %p202
      %p205 = scmp.ne.s32.totalorder %s190, %s204
      %p206 = scmp.eq.s32.totalorder %s26, 0
      %p207 = por %p205, %p206
      %s209 = sadd.s32 %s208, 1
      %p212 = scmp.eq.s32.totalorder %s20, 1
      %p213 = scmp.ne.s32.totalorder %s208, %s210
      %p214 = scmp.eq.s32.totalorder %s20, 0
      %p215 = por %p213, %p214
      %p216 = scmp.ne.s32.totalorder %s208, %s210
      %p217 = scmp.eq.s32.totalorder %s25, 1
      %p218 = por %p216, %p217
      %p219 = scmp.ne.s32.totalorder %s210, %s211
      %p220 = scmp.eq.s32.totalorder %s25, 0
      %p221 = por %p219, %p220
      %p222 = scmp.ne.s32.totalorder %s210, %s211
      %p223 = scmp.eq.s32.totalorder %s26, 1
      %p224 = por %p222, %p223
      %p226 = scmp.ne.s32.totalorder %s211, %s225
      %p227 = scmp.eq.s32.totalorder %s26, 0
      %p228 = por %p226, %p227
      %s230 = sadd.s32 %s229, 1
      %p233 = scmp.eq.s32.totalorder %s20, 1
      %p234 = scmp.ne.s32.totalorder %s229, %s231
      %p235 = scmp.eq.s32.totalorder %s20, 0
      %p236 = por %p234, %p235
      %p237 = scmp.ne.s32.totalorder %s229, %s231
      %p238 = scmp.eq.s32.totalorder %s25, 1
      %p239 = por %p237, %p238
      %p240 = scmp.ne.s32.totalorder %s231, %s232
      %p241 = scmp.eq.s32.totalorder %s25, 0
      %p242 = por %p240, %p241
      %p243 = scmp.ne.s32.totalorder %s231, %s232
      %p244 = scmp.eq.s32.totalorder %s26, 1
      %p245 = por %p243, %p244
      %p247 = scmp.ne.s32.totalorder %s232, %s246
      %p248 = scmp.eq.s32.totalorder %s26, 0
      %p249 = por %p247, %p248
      %s250 = ssub.s32 %s27, %s39
      %s251 = ssub.s32 %s28, %s35
      %s252 = sor.u32 %s250, %s251
      %p253 = scmp.eq.s32.totalorder %s252, 0
      %s255 = sadd.s32 %s254, 1
      %s256 = scalar_select %p253, %s254, %s255
      %p259 = pneg %p253
      %p260 = scmp.eq.s32.totalorder %s20, 1
      %p261 = por %p259, %p260
      %p262 = scmp.ne.s32.totalorder %s254, %s257
      %p263 = scmp.eq.s32.totalorder %s20, 0
      %p264 = por %p262, %p263
      %p265 = scmp.ne.s32.totalorder %s254, %s257
      %p266 = scmp.eq.s32.totalorder %s25, 1
      %p267 = por %p265, %p266
      %p268 = scmp.ne.s32.totalorder %s257, %s258
      %p269 = scmp.eq.s32.totalorder %s25, 0
      %p270 = por %p268, %p269
      %p271 = scmp.ne.s32.totalorder %s257, %s258
      %p272 = scmp.eq.s32.totalorder %s26, 1
      %p273 = por %p271, %p272
      %p275 = scmp.ne.s32.totalorder %s258, %s274
      %p276 = scmp.eq.s32.totalorder %s26, 0
      %p277 = por %p275, %p276
      %p278 = scmp.le.s32.totalorder 1, %s20
      %p279 = scmp.lt.s32.totalorder %s20, 3
      %p280 = pnand %p278, %p279
      %p281 = pneg %p280
      // Predicated region
      $region9: #{tpu_custom_call.1} parent=5 // pred_check
        _
      $region10: #{tpu_custom_call.1} parent=5 // pred_check_branch
        %283 = sbr.rel (%p280) target = $region12
      $region11: #{tpu_custom_call.1} parent=5 // pred_region
        %s284 = ssub.s32 %s20, 1
        // Predicated region
        $region13: #{tpu_custom_call.1} parent=11 // pred_check
          %p285 = pneg %p53
        $region14: #{tpu_custom_call.1} parent=11 // pred_check_branch
          %287 = sbr.rel (%p285) target = $region16
        $region15: #{tpu_custom_call.1} parent=11 // pred_region
          _
        $region16: #{tpu_custom_call.1} parent=11 // pred_fallthru
          _
        // Predicated region
        $region17: #{tpu_custom_call.1} parent=11 // pred_check
          %p288 = pneg %p74
        $region18: #{tpu_custom_call.1} parent=11 // pred_check_branch
          %290 = sbr.rel (%p288) target = $region20
        $region19: #{tpu_custom_call.1} parent=11 // pred_region
          _
        $region20: #{tpu_custom_call.1} parent=11 // pred_fallthru
          _
        // Predicated region
        $region21: #{tpu_custom_call.1} parent=11 // pred_check
          %p291 = pneg %p95
        $region22: #{tpu_custom_call.1} parent=11 // pred_check_branch
          %293 = sbr.rel (%p291) target = $region24
        $region23: #{tpu_custom_call.1} parent=11 // pred_region
          _
        $region24: #{tpu_custom_call.1} parent=11 // pred_fallthru
          _
        // Predicated region
        $region25: #{tpu_custom_call.1} parent=11 // pred_check
          %p294 = pneg %p116
        $region26: #{tpu_custom_call.1} parent=11 // pred_check_branch
          %296 = sbr.rel (%p294) target = $region28
        $region27: #{tpu_custom_call.1} parent=11 // pred_region
          _
        $region28: #{tpu_custom_call.1} parent=11 // pred_fallthru
          _
        // Predicated region
        $region29: #{tpu_custom_call.1} parent=11 // pred_check
          %p297 = pneg %p137
        $region30: #{tpu_custom_call.1} parent=11 // pred_check_branch
          %299 = sbr.rel (%p297) target = $region32
        $region31: #{tpu_custom_call.1} parent=11 // pred_region
          _
        $region32: #{tpu_custom_call.1} parent=11 // pred_fallthru
          _
        // Predicated region
        $region33: #{tpu_custom_call.1} parent=11 // pred_check
          %p300 = pneg %p158
        $region34: #{tpu_custom_call.1} parent=11 // pred_check_branch
          %302 = sbr.rel (%p300) target = $region36
        $region35: #{tpu_custom_call.1} parent=11 // pred_region
          _
        $region36: #{tpu_custom_call.1} parent=11 // pred_fallthru
          _
        // Predicated region
        $region37: #{tpu_custom_call.1} parent=11 // pred_check
          %p303 = pneg %p179
        $region38: #{tpu_custom_call.1} parent=11 // pred_check_branch
          %305 = sbr.rel (%p303) target = $region40
        $region39: #{tpu_custom_call.1} parent=11 // pred_region
          _
        $region40: #{tpu_custom_call.1} parent=11 // pred_fallthru
          _
        // Predicated region
        $region41: #{tpu_custom_call.1} parent=11 // pred_check
          %p306 = pneg %p200
        $region42: #{tpu_custom_call.1} parent=11 // pred_check_branch
          %308 = sbr.rel (%p306) target = $region44
        $region43: #{tpu_custom_call.1} parent=11 // pred_region
          _
        $region44: #{tpu_custom_call.1} parent=11 // pred_fallthru
          _
        // Predicated region
        $region45: #{tpu_custom_call.1} parent=11 // pred_check
          %p309 = pneg %p221
        $region46: #{tpu_custom_call.1} parent=11 // pred_check_branch
          %311 = sbr.rel (%p309) target = $region48
        $region47: #{tpu_custom_call.1} parent=11 // pred_region
          _
        $region48: #{tpu_custom_call.1} parent=11 // pred_fallthru
          _
        // Predicated region
        $region49: #{tpu_custom_call.1} parent=11 // pred_check
          %p312 = pneg %p242
        $region50: #{tpu_custom_call.1} parent=11 // pred_check_branch
          %314 = sbr.rel (%p312) target = $region52
        $region51: #{tpu_custom_call.1} parent=11 // pred_region
          _
        $region52: #{tpu_custom_call.1} parent=11 // pred_fallthru
          _
      $region12: #{tpu_custom_call.1} parent=5 // pred_fallthru
        _
      %p315 = scmp.lt.s32.totalorder %s20, 2
      // Predicated region
      $region53: #{tpu_custom_call.1} parent=5 // pred_check
        %p316 = pneg %p315
      $region54: #{tpu_custom_call.1} parent=5 // pred_check_branch
        %318 = sbr.rel (%p316) target = $region56
      $region55: #{tpu_custom_call.1} parent=5 // pred_region
        _
      $region56: #{tpu_custom_call.1} parent=5 // pred_fallthru
        _
      %p319 = scmp.le.s32.totalorder 1, %s20
      %p320 = scmp.lt.s32.totalorder %s20, 3
      %p321 = pnand %p319, %p320
      %p322 = pneg %p321
      // Predicated region
      $region57: #{tpu_custom_call.1} parent=5 // pred_check
        _
      $region58: #{tpu_custom_call.1} parent=5 // pred_check_branch
        %324 = sbr.rel (%p321) target = $region60
      $region59: #{tpu_custom_call.1} parent=5 // pred_region
        %s325 = ssub.s32 %s20, 1
        %p326 = pneg %p53
        %p327 = pneg %p50
        %p328 = pneg %p74
        %p329 = pneg %p71
        %p330 = pneg %p95
        %p331 = pneg %p92
        %p332 = pneg %p116
        %p333 = pneg %p113
        %p334 = pneg %p137
        %p335 = pneg %p134
        %p336 = pneg %p158
        %p337 = pneg %p155
        %p338 = pneg %p179
        %p339 = pneg %p176
        %p340 = pneg %p200
        %p341 = pneg %p197
        %p342 = pneg %p221
        %p343 = pneg %p218
        %p344 = pneg %p242
        %p345 = pneg %p239
        %p346 = pneg %p270
        %p347 = pneg %p267
        %s348 = sand.u32 %s257, 1
        %s349 = scalar_lea.sflag [#allocation5], %s348
        %s350 = sand.u32 %s257, 1
        %s351 = smul.addr %s350, 4
        %s352 = scalar_lea.vmem [#allocation4], %s351
        %s354 = smul.u32 %s30, 128
        %s355 = sshra.s32 %s354, 7
        %s356 = sand.u32 %s354, 127
        %s357 = smul.u32 %s29, 2
        %s358 = sadd.s32 %s355, %s357
        %s359 = smul.addr %s358, 4
        %s360 = scalar_lea.vmem %s0, %s359
        %p362 = scmp.lt.u32.totalorder 8, 8
        %p363 = pneg %p362
        // Predicated region
        $region61: #{tpu_custom_call.1} parent=59 // pred_check
          _
        $region62: #{tpu_custom_call.1} parent=59 // pred_check_branch
          %365 = sbr.rel (%p362) target = $region64
        $region63: #{tpu_custom_call.1} parent=59 // pred_region
          %s380 = sand.u32 8, 7
          %p381 = scmp.eq.s32.totalorder %s380, 0
          // Predicated region
          $region76: #{tpu_custom_call.1} parent=63 // pred_check
            %p382 = pneg %p381
          $region77: #{tpu_custom_call.1} parent=63 // pred_check_branch
            %384 = sbr.rel (%p382) target = $region79
          $region78: #{tpu_custom_call.1} parent=63 // pred_region
            loop: start=0, step=1, limit=1
            $region80: #{tpu_custom_call.1} parent=78 // loop_pre_header
              _
            $region81: #{tpu_custom_call.1} parent=78 // loop_header
              %s386 = sphi 0, %s390
              %p387 = scmp.ge.s32.totalorder %s386, 1
              %s391 = sphi %s360, %s360
              %s392 = sphi [#allocation2], [#allocation2]
            $region82: #{tpu_custom_call.1} parent=78 // loop_header_branch
              %389 = sbr.rel (%p387) target = $region86
            $region83: #{tpu_custom_call.1} parent=78 // loop_body
              %v393 = vld [vmem:[%s391] sm:$0xff]
              %394 = vst [vmem:[%s392] sm:$0xff] %v393
            $region84: #{tpu_custom_call.1} parent=78 // loop_footer
              %s390 = sadd.s32 1, %s386
            $region85: #{tpu_custom_call.1} parent=78 // loop_footer_branch
              %385 = sbr.rel target = $region81
            $region86: #{tpu_custom_call.1} parent=78 // loop_exit
              _
          $region79: #{tpu_custom_call.1} parent=63 // pred_fallthru
            _
          %p395 = pneg %p381
          // Predicated region
          $region87: #{tpu_custom_call.1} parent=63 // pred_check
            _
          $region88: #{tpu_custom_call.1} parent=63 // pred_check_branch
            %397 = sbr.rel (%p381) target = $region90
          $region89: #{tpu_custom_call.1} parent=63 // pred_region
            %s398 = sand.u32 8, 7
          $region90: #{tpu_custom_call.1} parent=63 // pred_fallthru
            _
        $region64: #{tpu_custom_call.1} parent=59 // pred_fallthru
          _
        // Predicated region
        $region65: #{tpu_custom_call.1} parent=59 // pred_check
          %p366 = pneg %p362
        $region66: #{tpu_custom_call.1} parent=59 // pred_check_branch
          %368 = sbr.rel (%p366) target = $region68
        $region67: #{tpu_custom_call.1} parent=59 // pred_region
          %s369 = sshllo.u32 0, 8
          loop: start=0, step=1, limit=1
          $region69: #{tpu_custom_call.1} parent=67 // loop_pre_header
            _
          $region70: #{tpu_custom_call.1} parent=67 // loop_header
            %s371 = sphi 0, %s375
            %p372 = scmp.ge.s32.totalorder %s371, 1
            %s376 = sphi %s360, %s360
            %s377 = sphi [#allocation2], [#allocation2]
          $region71: #{tpu_custom_call.1} parent=67 // loop_header_branch
            %374 = sbr.rel (%p372) target = $region75
          $region72: #{tpu_custom_call.1} parent=67 // loop_body
            %v378 = vld [vmem:[%s376] sm:%s369]
            %379 = vst [vmem:[%s377] sm:%s369] %v378
          $region73: #{tpu_custom_call.1} parent=67 // loop_footer
            %s375 = sadd.s32 1, %s371
          $region74: #{tpu_custom_call.1} parent=67 // loop_footer_branch
            %370 = sbr.rel target = $region70
          $region75: #{tpu_custom_call.1} parent=67 // loop_exit
            _
        $region68: #{tpu_custom_call.1} parent=59 // pred_fallthru
          _
        // Predicated region
        $region91: #{tpu_custom_call.1} parent=59 // pred_check
          _
        $region92: #{tpu_custom_call.1} parent=59 // pred_check_branch
          %401 = sbr.rel (0) target = $region94
        $region93: #{tpu_custom_call.1} parent=59 // pred_region
          %402 = vsyncadd [#allocation3], 128
        $region94: #{tpu_custom_call.1} parent=59 // pred_fallthru
          _
        %s403 = smul.u32 4, 1
        %s404 = smul.u32 %s403, 1
        %s405 = smul.u32 %s404, 2
        %s406 = sshll.u32 %s405, 4
        %407 = dma.done [#allocation3], %s406
        %v408 = vld [vmem:[#allocation2] sm:$0xff]
        %v410 = vcombine.high %v408, %v408
        %412 = vrot.lane.b32.xlu0 %v408, 1
        %v413 = vpop.permute.xlu0 %412
        %414 = vrot.lane.b32.xlu0 %v410, 1
        %v415 = vpop.permute.xlu0 %414
        %v416 = vlaneseq
        %v417 = vand.u32 %v416, 127
        %vm418 = vcmp.lt.s32.totalorder %v417, 1
        %v419 = vsel %vm418, %v413, %v415
        %v420 = vsel %vm418, %v415, %v413
        %v421 = vpack.c.bf16 %v420, %v420
        %v422 = vpack.c.bf16 %v419, %v419
        %v423 = vld [vmem:[%s1] sm:$0xf]
        %v424 = vld [vmem:[%s1 + $0x4] sm:$0xf]
        %v425 = vld [vmem:[%s2] sm:$0xf]
        %v426 = vld [vmem:[%s2 + $0x4] sm:$0xf]
        %v427 = vpack.c.bf16 %v408, %v408
        %v428 = vpack.c.bf16 %v410, %v410
        %v431 = vunpack.c.l.b16 %v425
        %v432 = vunpack.c.l.b16 %v426
        %v433 = vpack.c.b16 %v432, %v431
        %vm434 = vcmask 31744
        %v436 = vsel %vm434, %v433, 0
        %vm438 = vcmask 1041408
        %v440 = vsel %vm438, %v427, 0
        %v443 = vsel %vm438, %v428, 0
        %445 = vmatprep.subr.bf16.mxu0 %v443
        %446 = vmatpush1.bf16.msra.mxu0 %v440
        %447 = vmatprep.subr.bf16.mxu0 0
        %448 = vmatpush1.bf16.msra.mxu0 0
        %449 = vmatprep.subr.bf16.mxu0 0
        %450 = vmatpush1.bf16.msra.mxu0 0
        %451 = vmatprep.subr.bf16.mxu0 0
        %452 = vmatpush1.bf16.msra.mxu0 0
        %453 = vmatprep.subr.bf16.mxu0 0
        %454 = vmatpush1.bf16.msra.mxu0 0
        %455 = vmatprep.subr.bf16.mxu0 0
        %456 = vmatpush1.bf16.msra.mxu0 0
        %457 = vmatprep.subr.bf16.mxu0 0
        %458 = vmatpush1.bf16.msra.mxu0 0
        %459 = vmatprep.subr.bf16.mxu0 0
        %460 = vmatpush1.bf16.msra.mxu0 0
        %461 = vmatprep.subr.bf16.mxu0 0
        %462 = vmatpush1.bf16.msra.mxu0 0
        %463 = vmatprep.subr.bf16.mxu0 0
        %464 = vmatpush1.bf16.msra.mxu0 0
        %465 = vmatprep.subr.bf16.mxu0 0
        %466 = vmatpush1.bf16.msra.mxu0 0
        %467 = vmatprep.subr.bf16.mxu0 0
        %468 = vmatpush1.bf16.msra.mxu0 0
        %469 = vmatprep.subr.bf16.mxu0 0
        %470 = vmatpush1.bf16.msra.mxu0 0
        %471 = vmatprep.subr.bf16.mxu0 0
        %472 = vmatpush1.bf16.msra.mxu0 0
        %473 = vmatprep.subr.bf16.mxu0 0
        %474 = vmatpush1.bf16.msra.mxu0 0
        %475 = vmatprep.subr.bf16.mxu0 0
        %476 = vmatpush1.bf16.msra.mxu0 0
        %477 = vmatprep.mubr.bf16.mxu0 0
        %478 = vmatmul.mubr.bf16.gmra.mrb[0].mxu0 %v436
        %v479 = vpop.f32.mrb[0].mxu0
        %v480 = vadd.f32 0.0, %v479
        %v481 = vpop.f32.mrb[0].mxu0
        %v482 = vadd.f32 0.0, %v481
        %v483 = vpop.f32.mrb[0].mxu0
        %v484 = vadd.f32 0.0, %v483
        %v485 = vpop.f32.mrb[0].mxu0
        %v486 = vadd.f32 0.0, %v485
        %487 = vdwg.mxu0
        %v490 = vunpack.c.l.b16 %v423
        %v491 = vunpack.c.l.b16 %v424
        %v492 = vpack.c.b16 %v491, %v490
        %v494 = vsel %vm434, %v492, 0
        %v497 = vsel %vm438, %v421, 0
        %v500 = vsel %vm438, %v422, 0
        %502 = vmatprep.subr.bf16.mxu0 %v500
        %503 = vmatpush1.bf16.msra.mxu0 %v497
        %504 = vmatprep.subr.bf16.mxu0 0
        %505 = vmatpush1.bf16.msra.mxu0 0
        %506 = vmatprep.subr.bf16.mxu0 0
        %507 = vmatpush1.bf16.msra.mxu0 0
        %508 = vmatprep.subr.bf16.mxu0 0
        %509 = vmatpush1.bf16.msra.mxu0 0
        %510 = vmatprep.subr.bf16.mxu0 0
        %511 = vmatpush1.bf16.msra.mxu0 0
        %512 = vmatprep.subr.bf16.mxu0 0
        %513 = vmatpush1.bf16.msra.mxu0 0
        %514 = vmatprep.subr.bf16.mxu0 0
        %515 = vmatpush1.bf16.msra.mxu0 0
        %516 = vmatprep.subr.bf16.mxu0 0
        %517 = vmatpush1.bf16.msra.mxu0 0
        %518 = vmatprep.subr.bf16.mxu0 0
        %519 = vmatpush1.bf16.msra.mxu0 0
        %520 = vmatprep.subr.bf16.mxu0 0
        %521 = vmatpush1.bf16.msra.mxu0 0
        %522 = vmatprep.subr.bf16.mxu0 0
        %523 = vmatpush1.bf16.msra.mxu0 0
        %524 = vmatprep.subr.bf16.mxu0 0
        %525 = vmatpush1.bf16.msra.mxu0 0
        %526 = vmatprep.subr.bf16.mxu0 0
        %527 = vmatpush1.bf16.msra.mxu0 0
        %528 = vmatprep.subr.bf16.mxu0 0
        %529 = vmatpush1.bf16.msra.mxu0 0
        %530 = vmatprep.subr.bf16.mxu0 0
        %531 = vmatpush1.bf16.msra.mxu0 0
        %532 = vmatprep.subr.bf16.mxu0 0
        %533 = vmatpush1.bf16.msra.mxu0 0
        %534 = vmatprep.mubr.bf16.mxu0 0
        %535 = vmatmul.mubr.bf16.gmra.mrb[0].mxu0 %v494
        %v536 = vpop.f32.mrb[0].mxu0
        %v537 = vadd.f32 %v480, %v536
        %v538 = vpop.f32.mrb[0].mxu0
        %v539 = vadd.f32 %v482, %v538
        %v540 = vpop.f32.mrb[0].mxu0
        %v541 = vadd.f32 %v484, %v540
        %v542 = vpop.f32.mrb[0].mxu0
        %v543 = vadd.f32 %v486, %v542
        %544 = vdwg.mxu0
        loop: start=0, step=1, limit=2
        $region95: #{tpu_custom_call.1} parent=59 // loop_pre_header
          _
        $region96: #{tpu_custom_call.1} parent=59 // loop_header
          %s546 = sphi 0, %s550
          %p547 = scmp.ge.s32.totalorder %s546, 2
          %v551 = vphi %v537, %v1370
          %v552 = vphi %v539, %v1371
          %v553 = vphi %v541, %v1372
          %v554 = vphi %v543, %v1373
          %v555 = vphi 0.0, %v1374
          %v556 = vphi 0.0, %v1375
        $region97: #{tpu_custom_call.1} parent=59 // loop_header_branch
          %549 = sbr.rel (%p547) target = $region101
        $region98: #{tpu_custom_call.1} parent=59 // loop_body
          %s557 = smul.u32 %s546, 3
          %v558 = vpack.c.bf16 %v553, %v551
          %v559 = vpack.c.bf16 %v554, %v552
          %560 = vrot.lane.b32.xlu0 %v551, 1
          %v561 = vpop.permute.xlu0 %560
          %562 = vrot.lane.b32.xlu0 %v553, 1
          %v563 = vpop.permute.xlu0 %562
          %564 = vrot.lane.b32.xlu0 %v552, 1
          %v565 = vpop.permute.xlu0 %564
          %566 = vrot.lane.b32.xlu0 %v554, 1
          %v567 = vpop.permute.xlu0 %566
          %v568 = vsel %vm418, %v561, %v565
          %v569 = vsel %vm418, %v563, %v567
          %v570 = vsel %vm418, %v565, %v561
          %v571 = vsel %vm418, %v567, %v563
          %v572 = vpack.c.bf16 %v571, %v570
          %v573 = vpack.c.bf16 %v569, %v568
          %s574 = smul.u32 %s557, 2
          %s575 = smul.addr %s574, 4
          %s576 = scalar_lea.vmem %s3, %s575
          %v577 = vld [vmem:[%s576] sm:$0xf]
          %v578 = vld [vmem:[%s576 + $0x4] sm:$0xf]
          %s579 = smul.addr %s574, 4
          %s580 = scalar_lea.vmem %s4, %s579
          %v581 = vld [vmem:[%s580] sm:$0xf]
          %v582 = vld [vmem:[%s580 + $0x4] sm:$0xf]
          %v585 = vunpack.c.l.b16 %v581
          %v586 = vunpack.c.l.b16 %v582
          %v587 = vpack.c.b16 %v586, %v585
          %vm588 = vcmask 130048
          %v590 = vsel %vm588, %v587, 0
          %592 = vmatprep.subr.bf16.mxu0 %v559
          %593 = vmatpush1.bf16.msra.mxu0 %v558
          %594 = vmatprep.subr.bf16.mxu0 0
          %595 = vmatpush1.bf16.msra.mxu0 0
          %596 = vmatprep.subr.bf16.mxu0 0
          %597 = vmatpush1.bf16.msra.mxu0 0
          %598 = vmatprep.subr.bf16.mxu0 0
          %599 = vmatpush1.bf16.msra.mxu0 0
          %600 = vmatprep.subr.bf16.mxu0 0
          %601 = vmatpush1.bf16.msra.mxu0 0
          %602 = vmatprep.subr.bf16.mxu0 0
          %603 = vmatpush1.bf16.msra.mxu0 0
          %604 = vmatprep.subr.bf16.mxu0 0
          %605 = vmatpush1.bf16.msra.mxu0 0
          %606 = vmatprep.subr.bf16.mxu0 0
          %607 = vmatpush1.bf16.msra.mxu0 0
          %608 = vmatprep.subr.bf16.mxu0 0
          %609 = vmatpush1.bf16.msra.mxu0 0
          %610 = vmatprep.subr.bf16.mxu0 0
          %611 = vmatpush1.bf16.msra.mxu0 0
          %612 = vmatprep.subr.bf16.mxu0 0
          %613 = vmatpush1.bf16.msra.mxu0 0
          %614 = vmatprep.subr.bf16.mxu0 0
          %615 = vmatpush1.bf16.msra.mxu0 0
          %616 = vmatprep.subr.bf16.mxu0 0
          %617 = vmatpush1.bf16.msra.mxu0 0
          %618 = vmatprep.subr.bf16.mxu0 0
          %619 = vmatpush1.bf16.msra.mxu0 0
          %620 = vmatprep.subr.bf16.mxu0 0
          %621 = vmatpush1.bf16.msra.mxu0 0
          %622 = vmatprep.subr.bf16.mxu0 0
          %623 = vmatpush1.bf16.msra.mxu0 0
          %624 = vmatprep.mubr.bf16.mxu0 0
          %625 = vmatmul.mubr.bf16.gmra.mrb[0].mxu0 %v590
          %v626 = vpop.f32.mrb[0].mxu0
          %v627 = vadd.f32 0.0, %v626
          %v628 = vpop.f32.mrb[0].mxu0
          %v629 = vadd.f32 0.0, %v628
          %v630 = vpop.f32.mrb[0].mxu0
          %v631 = vadd.f32 0.0, %v630
          %v632 = vpop.f32.mrb[0].mxu0
          %v633 = vadd.f32 0.0, %v632
          %634 = vdwg.mxu0
          %v637 = vunpack.c.l.b16 %v577
          %v638 = vunpack.c.l.b16 %v578
          %v639 = vpack.c.b16 %v638, %v637
          %v641 = vsel %vm588, %v639, 0
          %643 = vmatprep.subr.bf16.mxu0 %v573
          %644 = vmatpush1.bf16.msra.mxu0 %v572
          %645 = vmatprep.subr.bf16.mxu0 0
          %646 = vmatpush1.bf16.msra.mxu0 0
          %647 = vmatprep.subr.bf16.mxu0 0
          %648 = vmatpush1.bf16.msra.mxu0 0
          %649 = vmatprep.subr.bf16.mxu0 0
          %650 = vmatpush1.bf16.msra.mxu0 0
          %651 = vmatprep.subr.bf16.mxu0 0
          %652 = vmatpush1.bf16.msra.mxu0 0
          %653 = vmatprep.subr.bf16.mxu0 0
          %654 = vmatpush1.bf16.msra.mxu0 0
          %655 = vmatprep.subr.bf16.mxu0 0
          %656 = vmatpush1.bf16.msra.mxu0 0
          %657 = vmatprep.subr.bf16.mxu0 0
          %658 = vmatpush1.bf16.msra.mxu0 0
          %659 = vmatprep.subr.bf16.mxu0 0
          %660 = vmatpush1.bf16.msra.mxu0 0
          %661 = vmatprep.subr.bf16.mxu0 0
          %662 = vmatpush1.bf16.msra.mxu0 0
          %663 = vmatprep.subr.bf16.mxu0 0
          %664 = vmatpush1.bf16.msra.mxu0 0
          %665 = vmatprep.subr.bf16.mxu0 0
          %666 = vmatpush1.bf16.msra.mxu0 0
          %667 = vmatprep.subr.bf16.mxu0 0
          %668 = vmatpush1.bf16.msra.mxu0 0
          %669 = vmatprep.subr.bf16.mxu0 0
          %670 = vmatpush1.bf16.msra.mxu0 0
          %671 = vmatprep.subr.bf16.mxu0 0
          %672 = vmatpush1.bf16.msra.mxu0 0
          %673 = vmatprep.subr.bf16.mxu0 0
          %674 = vmatpush1.bf16.msra.mxu0 0
          %675 = vmatprep.mubr.bf16.mxu0 0
          %676 = vmatmul.mubr.bf16.gmra.mrb[0].mxu0 %v641
          %v677 = vpop.f32.mrb[0].mxu0
          %v678 = vadd.f32 %v627, %v677
          %v679 = vpop.f32.mrb[0].mxu0
          %v680 = vadd.f32 %v629, %v679
          %v681 = vpop.f32.mrb[0].mxu0
          %v682 = vadd.f32 %v631, %v681
          %v683 = vpop.f32.mrb[0].mxu0
          %v684 = vadd.f32 %v633, %v683
          %685 = vdwg.mxu0
          %v686 = vmax.f32 %v678, -30.0
          %v687 = vmax.f32 %v680, -30.0
          %v688 = vmax.f32 %v682, -30.0
          %v689 = vmax.f32 %v684, -30.0
          %v690 = vmin.f32 %v686, 30.0
          %v691 = vmin.f32 %v687, 30.0
          %v692 = vmin.f32 %v688, 30.0
          %v693 = vmin.f32 %v689, 30.0
          %v694 = vmul.f32 %v690, 1.442695
          %v695 = vpow.pop %v694
          %v696 = vmul.f32 %v691, 1.442695
          %v697 = vpow.pop %v696
          %v698 = vmul.f32 %v692, 1.442695
          %v699 = vpow.pop %v698
          %v700 = vmul.f32 %v693, 1.442695
          %v701 = vpow.pop %v700
          %v702 = vmul.f32 %v695, %v695
          %v703 = vmul.f32 %v697, %v697
          %v704 = vmul.f32 %v699, %v699
          %v705 = vmul.f32 %v701, %v701
          %v706 = vsub.f32 %v702, %v695
          %v707 = vsub.f32 %v703, %v697
          %v708 = vsub.f32 %v704, %v699
          %v709 = vsub.f32 %v705, %v701
          %v710 = vadd.f32 %v702, 1.0
          %v711 = vadd.f32 %v703, 1.0
          %v712 = vadd.f32 %v704, 1.0
          %v713 = vadd.f32 %v705, 1.0
          %v714 = vrcp.pop %v710
          %v715 = vrcp.pop %v711
          %v716 = vrcp.pop %v712
          %v717 = vrcp.pop %v713
          %v718 = vmul.f32 %v706, %v714
          %v719 = vmul.f32 %v707, %v715
          %v720 = vmul.f32 %v708, %v716
          %v721 = vmul.f32 %v709, %v717
          %s722 = smul.u32 %s557, 4
          %s723 = smul.addr %s722, 4
          %s724 = scalar_lea.vmem %s5, %s723
          %v725 = vld [vmem:[%s724] sm:$0xf]
          %v726 = vld [vmem:[%s724 + $0x4] sm:$0xf]
          %v727 = vld [vmem:[%s724 + $0x8] sm:$0xf]
          %v728 = vld [vmem:[%s724 + $0xc] sm:$0xf]
          %v729 = vpack.c.bf16 %v720, %v718
          %v730 = vpack.c.bf16 %v721, %v719
          %s731 = smul.u32 %s557, 32
          %s732 = scalar_lea.vmem %s6, %s731
          %v733 = vld [vmem:[%s732] sm:$0xff]
          %v734 = vld [vmem:[%s732 + $0x8] sm:$0xff]
          %v735 = vld [vmem:[%s732 + $0x10] sm:$0xff]
          %v736 = vld [vmem:[%s732 + $0x18] sm:$0xff]
          %738 = vset.pattern.permute.xlu0 0
          %739 = vperm.xlu0 %738, %v733
          %v740 = vpop.permute.xlu0 %739
          %743 = vset.pattern.permute.xlu0 0
          %744 = vperm.xlu0 %743, %v734
          %v745 = vpop.permute.xlu0 %744
          %748 = vset.pattern.permute.xlu0 0
          %749 = vperm.xlu0 %748, %v735
          %v750 = vpop.permute.xlu0 %749
          %753 = vset.pattern.permute.xlu0 0
          %754 = vperm.xlu0 %753, %v736
          %v755 = vpop.permute.xlu0 %754
          %v761 = vunpack.c.l.b16 %v725
          %v762 = vunpack.c.l.b16 %v726
          %v763 = vunpack.c.l.b16 %v727
          %v764 = vunpack.c.l.b16 %v728
          %v765 = vpack.c.b16 %v762, %v761
          %v766 = vpack.c.b16 %v764, %v763
          %v768 = vsel %vm588, %v765, 0
          %v771 = vsel %vm588, %v766, 0
          %773 = vmatprep.subr.bf16.mxu0 %v730
          %774 = vmatpush1.bf16.msra.mxu0 %v729
          %775 = vmatprep.subr.bf16.mxu0 0
          %776 = vmatpush1.bf16.msra.mxu0 0
          %777 = vmatprep.subr.bf16.mxu0 0
          %778 = vmatpush1.bf16.msra.mxu0 0
          %779 = vmatprep.subr.bf16.mxu0 0
          %780 = vmatpush1.bf16.msra.mxu0 0
          %781 = vmatprep.subr.bf16.mxu0 0
          %782 = vmatpush1.bf16.msra.mxu0 0
          %783 = vmatprep.subr.bf16.mxu0 0
          %784 = vmatpush1.bf16.msra.mxu0 0
          %785 = vmatprep.subr.bf16.mxu0 0
          %786 = vmatpush1.bf16.msra.mxu0 0
          %787 = vmatprep.subr.bf16.mxu0 0
          %788 = vmatpush1.bf16.msra.mxu0 0
          %789 = vmatprep.subr.bf16.mxu0 0
          %790 = vmatpush1.bf16.msra.mxu0 0
          %791 = vmatprep.subr.bf16.mxu0 0
          %792 = vmatpush1.bf16.msra.mxu0 0
          %793 = vmatprep.subr.bf16.mxu0 0
          %794 = vmatpush1.bf16.msra.mxu0 0
          %795 = vmatprep.subr.bf16.mxu0 0
          %796 = vmatpush1.bf16.msra.mxu0 0
          %797 = vmatprep.subr.bf16.mxu0 0
          %798 = vmatpush1.bf16.msra.mxu0 0
          %799 = vmatprep.subr.bf16.mxu0 0
          %800 = vmatpush1.bf16.msra.mxu0 0
          %801 = vmatprep.subr.bf16.mxu0 0
          %802 = vmatpush1.bf16.msra.mxu0 0
          %803 = vmatprep.subr.bf16.mxu0 0
          %804 = vmatpush1.bf16.msra.mxu0 0
          %805 = vmatprep.mubr.bf16.mxu0 0
          %806 = vmatmul.mubr.bf16.gmra.mrb[0].mxu0 %v768
          %v807 = vpop.f32.mrb[0].mxu0
          %v808 = vadd.f32 %v740, %v807
          %v809 = vpop.f32.mrb[0].mxu0
          %v810 = vadd.f32 %v740, %v809
          %v811 = vpop.f32.mrb[0].mxu0
          %v812 = vadd.f32 %v745, %v811
          %v813 = vpop.f32.mrb[0].mxu0
          %v814 = vadd.f32 %v745, %v813
          %815 = vmatprep.mubr.bf16.mxu0 0
          %816 = vmatmul.mubr.bf16.gmra.mrb[0].mxu0 %v771
          %v817 = vpop.f32.mrb[0].mxu0
          %v818 = vpop.f32.mrb[0].mxu0
          %v819 = vadd.f32 %v750, %v818
          %v820 = vpop.f32.mrb[0].mxu0
          %v821 = vpop.f32.mrb[0].mxu0
          %v822 = vadd.f32 %v755, %v821
          %823 = vdwg.mxu0
          %v824 = vadd.f32 %v808, %v551
          %v825 = vadd.f32 %v810, %v552
          %v826 = vadd.f32 %v812, %v553
          %v827 = vadd.f32 %v814, %v554
          %v828 = vadd.f32 %v555, %v819
          %v829 = vadd.f32 %v556, %v822
          %s830 = sadd.s32 %s557, 1
          %v831 = vpack.c.bf16 %v826, %v824
          %v832 = vpack.c.bf16 %v827, %v825
          %833 = vrot.lane.b32.xlu0 %v824, 2
          %v834 = vpop.permute.xlu0 %833
          %835 = vrot.lane.b32.xlu0 %v826, 2
          %v836 = vpop.permute.xlu0 %835
          %837 = vrot.lane.b32.xlu0 %v825, 2
          %v838 = vpop.permute.xlu0 %837
          %839 = vrot.lane.b32.xlu0 %v827, 2
          %v840 = vpop.permute.xlu0 %839
          %vm841 = vcmp.lt.s32.totalorder %v417, 2
          %v842 = vsel %vm841, %v834, %v838
          %v843 = vsel %vm841, %v836, %v840
          %v844 = vsel %vm841, %v838, %v834
          %v845 = vsel %vm841, %v840, %v836
          %v846 = vpack.c.bf16 %v845, %v844
          %v847 = vpack.c.bf16 %v843, %v842
          %s848 = smul.u32 %s830, 2
          %s849 = smul.addr %s848, 4
          %s850 = scalar_lea.vmem %s3, %s849
          %v851 = vld [vmem:[%s850] sm:$0xf]
          %v852 = vld [vmem:[%s850 + $0x4] sm:$0xf]
          %s853 = smul.addr %s848, 4
          %s854 = scalar_lea.vmem %s4, %s853
          %v855 = vld [vmem:[%s854] sm:$0xf]
          %v856 = vld [vmem:[%s854 + $0x4] sm:$0xf]
          %v859 = vunpack.c.l.b16 %v855
          %v860 = vunpack.c.l.b16 %v856
          %v861 = vpack.c.b16 %v860, %v859
          %v863 = vsel %vm588, %v861, 0
          %865 = vmatprep.subr.bf16.mxu0 %v832
          %866 = vmatpush1.bf16.msra.mxu0 %v831
          %867 = vmatprep.subr.bf16.mxu0 0
          %868 = vmatpush1.bf16.msra.mxu0 0
          %869 = vmatprep.subr.bf16.mxu0 0
          %870 = vmatpush1.bf16.msra.mxu0 0
          %871 = vmatprep.subr.bf16.mxu0 0
          %872 = vmatpush1.bf16.msra.mxu0 0
          %873 = vmatprep.subr.bf16.mxu0 0
          %874 = vmatpush1.bf16.msra.mxu0 0
          %875 = vmatprep.subr.bf16.mxu0 0
          %876 = vmatpush1.bf16.msra.mxu0 0
          %877 = vmatprep.subr.bf16.mxu0 0
          %878 = vmatpush1.bf16.msra.mxu0 0
          %879 = vmatprep.subr.bf16.mxu0 0
          %880 = vmatpush1.bf16.msra.mxu0 0
          %881 = vmatprep.subr.bf16.mxu0 0
          %882 = vmatpush1.bf16.msra.mxu0 0
          %883 = vmatprep.subr.bf16.mxu0 0
          %884 = vmatpush1.bf16.msra.mxu0 0
          %885 = vmatprep.subr.bf16.mxu0 0
          %886 = vmatpush1.bf16.msra.mxu0 0
          %887 = vmatprep.subr.bf16.mxu0 0
          %888 = vmatpush1.bf16.msra.mxu0 0
          %889 = vmatprep.subr.bf16.mxu0 0
          %890 = vmatpush1.bf16.msra.mxu0 0
          %891 = vmatprep.subr.bf16.mxu0 0
          %892 = vmatpush1.bf16.msra.mxu0 0
          %893 = vmatprep.subr.bf16.mxu0 0
          %894 = vmatpush1.bf16.msra.mxu0 0
          %895 = vmatprep.subr.bf16.mxu0 0
          %896 = vmatpush1.bf16.msra.mxu0 0
          %897 = vmatprep.mubr.bf16.mxu0 0
          %898 = vmatmul.mubr.bf16.gmra.mrb[0].mxu0 %v863
          %v899 = vpop.f32.mrb[0].mxu0
          %v900 = vadd.f32 0.0, %v899
          %v901 = vpop.f32.mrb[0].mxu0
          %v902 = vadd.f32 0.0, %v901
          %v903 = vpop.f32.mrb[0].mxu0
          %v904 = vadd.f32 0.0, %v903
          %v905 = vpop.f32.mrb[0].mxu0
          %v906 = vadd.f32 0.0, %v905
          %907 = vdwg.mxu0
          %v910 = vunpack.c.l.b16 %v851
          %v911 = vunpack.c.l.b16 %v852
          %v912 = vpack.c.b16 %v911, %v910
          %v914 = vsel %vm588, %v912, 0
          %916 = vmatprep.subr.bf16.mxu0 %v847
          %917 = vmatpush1.bf16.msra.mxu0 %v846
          %918 = vmatprep.subr.bf16.mxu0 0
          %919 = vmatpush1.bf16.msra.mxu0 0
          %920 = vmatprep.subr.bf16.mxu0 0
          %921 = vmatpush1.bf16.msra.mxu0 0
          %922 = vmatprep.subr.bf16.mxu0 0
          %923 = vmatpush1.bf16.msra.mxu0 0
          %924 = vmatprep.subr.bf16.mxu0 0
          %925 = vmatpush1.bf16.msra.mxu0 0
          %926 = vmatprep.subr.bf16.mxu0 0
          %927 = vmatpush1.bf16.msra.mxu0 0
          %928 = vmatprep.subr.bf16.mxu0 0
          %929 = vmatpush1.bf16.msra.mxu0 0
          %930 = vmatprep.subr.bf16.mxu0 0
          %931 = vmatpush1.bf16.msra.mxu0 0
          %932 = vmatprep.subr.bf16.mxu0 0
          %933 = vmatpush1.bf16.msra.mxu0 0
          %934 = vmatprep.subr.bf16.mxu0 0
          %935 = vmatpush1.bf16.msra.mxu0 0
          %936 = vmatprep.subr.bf16.mxu0 0
          %937 = vmatpush1.bf16.msra.mxu0 0
          %938 = vmatprep.subr.bf16.mxu0 0
          %939 = vmatpush1.bf16.msra.mxu0 0
          %940 = vmatprep.subr.bf16.mxu0 0
          %941 = vmatpush1.bf16.msra.mxu0 0
          %942 = vmatprep.subr.bf16.mxu0 0
          %943 = vmatpush1.bf16.msra.mxu0 0
          %944 = vmatprep.subr.bf16.mxu0 0
          %945 = vmatpush1.bf16.msra.mxu0 0
          %946 = vmatprep.subr.bf16.mxu0 0
          %947 = vmatpush1.bf16.msra.mxu0 0
          %948 = vmatprep.mubr.bf16.mxu0 0
          %949 = vmatmul.mubr.bf16.gmra.mrb[0].mxu0 %v914
          %v950 = vpop.f32.mrb[0].mxu0
          %v951 = vadd.f32 %v900, %v950
          %v952 = vpop.f32.mrb[0].mxu0
          %v953 = vadd.f32 %v902, %v952
          %v954 = vpop.f32.mrb[0].mxu0
          %v955 = vadd.f32 %v904, %v954
          %v956 = vpop.f32.mrb[0].mxu0
          %v957 = vadd.f32 %v906, %v956
          %958 = vdwg.mxu0
          %v959 = vmax.f32 %v951, -30.0
          %v960 = vmax.f32 %v953, -30.0
          %v961 = vmax.f32 %v955, -30.0
          %v962 = vmax.f32 %v957, -30.0
          %v963 = vmin.f32 %v959, 30.0
          %v964 = vmin.f32 %v960, 30.0
          %v965 = vmin.f32 %v961, 30.0
          %v966 = vmin.f32 %v962, 30.0
          %v967 = vmul.f32 %v963, 1.442695
          %v968 = vpow.pop %v967
          %v969 = vmul.f32 %v964, 1.442695
          %v970 = vpow.pop %v969
          %v971 = vmul.f32 %v965, 1.442695
          %v972 = vpow.pop %v971
          %v973 = vmul.f32 %v966, 1.442695
          %v974 = vpow.pop %v973
          %v975 = vmul.f32 %v968, %v968
          %v976 = vmul.f32 %v970, %v970
          %v977 = vmul.f32 %v972, %v972
          %v978 = vmul.f32 %v974, %v974
          %v979 = vsub.f32 %v975, %v968
          %v980 = vsub.f32 %v976, %v970
          %v981 = vsub.f32 %v977, %v972
          %v982 = vsub.f32 %v978, %v974
          %v983 = vadd.f32 %v975, 1.0
          %v984 = vadd.f32 %v976, 1.0
          %v985 = vadd.f32 %v977, 1.0
          %v986 = vadd.f32 %v978, 1.0
          %v987 = vrcp.pop %v983
          %v988 = vrcp.pop %v984
          %v989 = vrcp.pop %v985
          %v990 = vrcp.pop %v986
          %v991 = vmul.f32 %v979, %v987
          %v992 = vmul.f32 %v980, %v988
          %v993 = vmul.f32 %v981, %v989
          %v994 = vmul.f32 %v982, %v990
          %s995 = smul.u32 %s830, 4
          %s996 = smul.addr %s995, 4
          %s997 = scalar_lea.vmem %s5, %s996
          %v998 = vld [vmem:[%s997] sm:$0xf]
          %v999 = vld [vmem:[%s997 + $0x4] sm:$0xf]
          %v1000 = vld [vmem:[%s997 + $0x8] sm:$0xf]
          %v1001 = vld [vmem:[%s997 + $0xc] sm:$0xf]
          %v1002 = vpack.c.bf16 %v993, %v991
          %v1003 = vpack.c.bf16 %v994, %v992
          %s1004 = smul.u32 %s830, 32
          %s1005 = scalar_lea.vmem %s6, %s1004
          %v1006 = vld [vmem:[%s1005] sm:$0xff]
          %v1007 = vld [vmem:[%s1005 + $0x8] sm:$0xff]
          %v1008 = vld [vmem:[%s1005 + $0x10] sm:$0xff]
          %v1009 = vld [vmem:[%s1005 + $0x18] sm:$0xff]
          %1011 = vset.pattern.permute.xlu0 0
          %1012 = vperm.xlu0 %1011, %v1006
          %v1013 = vpop.permute.xlu0 %1012
          %1016 = vset.pattern.permute.xlu0 0
          %1017 = vperm.xlu0 %1016, %v1007
          %v1018 = vpop.permute.xlu0 %1017
          %1021 = vset.pattern.permute.xlu0 0
          %1022 = vperm.xlu0 %1021, %v1008
          %v1023 = vpop.permute.xlu0 %1022
          %1026 = vset.pattern.permute.xlu0 0
          %1027 = vperm.xlu0 %1026, %v1009
          %v1028 = vpop.permute.xlu0 %1027
          %v1034 = vunpack.c.l.b16 %v998
          %v1035 = vunpack.c.l.b16 %v999
          %v1036 = vunpack.c.l.b16 %v1000
          %v1037 = vunpack.c.l.b16 %v1001
          %v1038 = vpack.c.b16 %v1035, %v1034
          %v1039 = vpack.c.b16 %v1037, %v1036
          %v1041 = vsel %vm588, %v1038, 0
          %v1044 = vsel %vm588, %v1039, 0
          %1046 = vmatprep.subr.bf16.mxu0 %v1003
          %1047 = vmatpush1.bf16.msra.mxu0 %v1002
          %1048 = vmatprep.subr.bf16.mxu0 0
          %1049 = vmatpush1.bf16.msra.mxu0 0
          %1050 = vmatprep.subr.bf16.mxu0 0
          %1051 = vmatpush1.bf16.msra.mxu0 0
          %1052 = vmatprep.subr.bf16.mxu0 0
          %1053 = vmatpush1.bf16.msra.mxu0 0
          %1054 = vmatprep.subr.bf16.mxu0 0
          %1055 = vmatpush1.bf16.msra.mxu0 0
          %1056 = vmatprep.subr.bf16.mxu0 0
          %1057 = vmatpush1.bf16.msra.mxu0 0
          %1058 = vmatprep.subr.bf16.mxu0 0
          %1059 = vmatpush1.bf16.msra.mxu0 0
          %1060 = vmatprep.subr.bf16.mxu0 0
          %1061 = vmatpush1.bf16.msra.mxu0 0
          %1062 = vmatprep.subr.bf16.mxu0 0
          %1063 = vmatpush1.bf16.msra.mxu0 0
          %1064 = vmatprep.subr.bf16.mxu0 0
          %1065 = vmatpush1.bf16.msra.mxu0 0
          %1066 = vmatprep.subr.bf16.mxu0 0
          %1067 = vmatpush1.bf16.msra.mxu0 0
          %1068 = vmatprep.subr.bf16.mxu0 0
          %1069 = vmatpush1.bf16.msra.mxu0 0
          %1070 = vmatprep.subr.bf16.mxu0 0
          %1071 = vmatpush1.bf16.msra.mxu0 0
          %1072 = vmatprep.subr.bf16.mxu0 0
          %1073 = vmatpush1.bf16.msra.mxu0 0
          %1074 = vmatprep.subr.bf16.mxu0 0
          %1075 = vmatpush1.bf16.msra.mxu0 0
          %1076 = vmatprep.subr.bf16.mxu0 0
          %1077 = vmatpush1.bf16.msra.mxu0 0
          %1078 = vmatprep.mubr.bf16.mxu0 0
          %1079 = vmatmul.mubr.bf16.gmra.mrb[0].mxu0 %v1041
          %v1080 = vpop.f32.mrb[0].mxu0
          %v1081 = vadd.f32 %v1013, %v1080
          %v1082 = vpop.f32.mrb[0].mxu0
          %v1083 = vadd.f32 %v1013, %v1082
          %v1084 = vpop.f32.mrb[0].mxu0
          %v1085 = vadd.f32 %v1018, %v1084
          %v1086 = vpop.f32.mrb[0].mxu0
          %v1087 = vadd.f32 %v1018, %v1086
          %1088 = vmatprep.mubr.bf16.mxu0 0
          %1089 = vmatmul.mubr.bf16.gmra.mrb[0].mxu0 %v1044
          %v1090 = vpop.f32.mrb[0].mxu0
          %v1091 = vpop.f32.mrb[0].mxu0
          %v1092 = vadd.f32 %v1023, %v1091
          %v1093 = vpop.f32.mrb[0].mxu0
          %v1094 = vpop.f32.mrb[0].mxu0
          %v1095 = vadd.f32 %v1028, %v1094
          %1096 = vdwg.mxu0
          %v1097 = vadd.f32 %v1081, %v824
          %v1098 = vadd.f32 %v1083, %v825
          %v1099 = vadd.f32 %v1085, %v826
          %v1100 = vadd.f32 %v1087, %v827
          %v1101 = vadd.f32 %v828, %v1092
          %v1102 = vadd.f32 %v829, %v1095
          %s1103 = sadd.s32 %s557, 2
          %v1104 = vpack.c.bf16 %v1099, %v1097
          %v1105 = vpack.c.bf16 %v1100, %v1098
          %1106 = vrot.lane.b32.xlu0 %v1097, 4
          %v1107 = vpop.permute.xlu0 %1106
          %1108 = vrot.lane.b32.xlu0 %v1099, 4
          %v1109 = vpop.permute.xlu0 %1108
          %1110 = vrot.lane.b32.xlu0 %v1098, 4
          %v1111 = vpop.permute.xlu0 %1110
          %1112 = vrot.lane.b32.xlu0 %v1100, 4
          %v1113 = vpop.permute.xlu0 %1112
          %vm1114 = vcmp.lt.s32.totalorder %v417, 4
          %v1115 = vsel %vm1114, %v1107, %v1111
          %v1116 = vsel %vm1114, %v1109, %v1113
          %v1117 = vsel %vm1114, %v1111, %v1107
          %v1118 = vsel %vm1114, %v1113, %v1109
          %v1119 = vpack.c.bf16 %v1118, %v1117
          %v1120 = vpack.c.bf16 %v1116, %v1115
          %s1121 = smul.u32 %s1103, 2
          %s1122 = smul.addr %s1121, 4
          %s1123 = scalar_lea.vmem %s3, %s1122
          %v1124 = vld [vmem:[%s1123] sm:$0xf]
          %v1125 = vld [vmem:[%s1123 + $0x4] sm:$0xf]
          %s1126 = smul.addr %s1121, 4
          %s1127 = scalar_lea.vmem %s4, %s1126
          %v1128 = vld [vmem:[%s1127] sm:$0xf]
          %v1129 = vld [vmem:[%s1127 + $0x4] sm:$0xf]
          %v1132 = vunpack.c.l.b16 %v1128
          %v1133 = vunpack.c.l.b16 %v1129
          %v1134 = vpack.c.b16 %v1133, %v1132
          %v1136 = vsel %vm588, %v1134, 0
          %1138 = vmatprep.subr.bf16.mxu0 %v1105
          %1139 = vmatpush1.bf16.msra.mxu0 %v1104
          %1140 = vmatprep.subr.bf16.mxu0 0
          %1141 = vmatpush1.bf16.msra.mxu0 0
          %1142 = vmatprep.subr.bf16.mxu0 0
          %1143 = vmatpush1.bf16.msra.mxu0 0
          %1144 = vmatprep.subr.bf16.mxu0 0
          %1145 = vmatpush1.bf16.msra.mxu0 0
          %1146 = vmatprep.subr.bf16.mxu0 0
          %1147 = vmatpush1.bf16.msra.mxu0 0
          %1148 = vmatprep.subr.bf16.mxu0 0
          %1149 = vmatpush1.bf16.msra.mxu0 0
          %1150 = vmatprep.subr.bf16.mxu0 0
          %1151 = vmatpush1.bf16.msra.mxu0 0
          %1152 = vmatprep.subr.bf16.mxu0 0
          %1153 = vmatpush1.bf16.msra.mxu0 0
          %1154 = vmatprep.subr.bf16.mxu0 0
          %1155 = vmatpush1.bf16.msra.mxu0 0
          %1156 = vmatprep.subr.bf16.mxu0 0
          %1157 = vmatpush1.bf16.msra.mxu0 0
          %1158 = vmatprep.subr.bf16.mxu0 0
          %1159 = vmatpush1.bf16.msra.mxu0 0
          %1160 = vmatprep.subr.bf16.mxu0 0
          %1161 = vmatpush1.bf16.msra.mxu0 0
          %1162 = vmatprep.subr.bf16.mxu0 0
          %1163 = vmatpush1.bf16.msra.mxu0 0
          %1164 = vmatprep.subr.bf16.mxu0 0
          %1165 = vmatpush1.bf16.msra.mxu0 0
          %1166 = vmatprep.subr.bf16.mxu0 0
          %1167 = vmatpush1.bf16.msra.mxu0 0
          %1168 = vmatprep.subr.bf16.mxu0 0
          %1169 = vmatpush1.bf16.msra.mxu0 0
          %1170 = vmatprep.mubr.bf16.mxu0 0
          %1171 = vmatmul.mubr.bf16.gmra.mrb[0].mxu0 %v1136
          %v1172 = vpop.f32.mrb[0].mxu0
          %v1173 = vadd.f32 0.0, %v1172
          %v1174 = vpop.f32.mrb[0].mxu0
          %v1175 = vadd.f32 0.0, %v1174
          %v1176 = vpop.f32.mrb[0].mxu0
          %v1177 = vadd.f32 0.0, %v1176
          %v1178 = vpop.f32.mrb[0].mxu0
          %v1179 = vadd.f32 0.0, %v1178
          %1180 = vdwg.mxu0
          %v1183 = vunpack.c.l.b16 %v1124
          %v1184 = vunpack.c.l.b16 %v1125
          %v1185 = vpack.c.b16 %v1184, %v1183
          %v1187 = vsel %vm588, %v1185, 0
          %1189 = vmatprep.subr.bf16.mxu0 %v1120
          %1190 = vmatpush1.bf16.msra.mxu0 %v1119
          %1191 = vmatprep.subr.bf16.mxu0 0
          %1192 = vmatpush1.bf16.msra.mxu0 0
          %1193 = vmatprep.subr.bf16.mxu0 0
          %1194 = vmatpush1.bf16.msra.mxu0 0
          %1195 = vmatprep.subr.bf16.mxu0 0
          %1196 = vmatpush1.bf16.msra.mxu0 0
          %1197 = vmatprep.subr.bf16.mxu0 0
          %1198 = vmatpush1.bf16.msra.mxu0 0
          %1199 = vmatprep.subr.bf16.mxu0 0
          %1200 = vmatpush1.bf16.msra.mxu0 0
          %1201 = vmatprep.subr.bf16.mxu0 0
          %1202 = vmatpush1.bf16.msra.mxu0 0
          %1203 = vmatprep.subr.bf16.mxu0 0
          %1204 = vmatpush1.bf16.msra.mxu0 0
          %1205 = vmatprep.subr.bf16.mxu0 0
          %1206 = vmatpush1.bf16.msra.mxu0 0
          %1207 = vmatprep.subr.bf16.mxu0 0
          %1208 = vmatpush1.bf16.msra.mxu0 0
          %1209 = vmatprep.subr.bf16.mxu0 0
          %1210 = vmatpush1.bf16.msra.mxu0 0
          %1211 = vmatprep.subr.bf16.mxu0 0
          %1212 = vmatpush1.bf16.msra.mxu0 0
          %1213 = vmatprep.subr.bf16.mxu0 0
          %1214 = vmatpush1.bf16.msra.mxu0 0
          %1215 = vmatprep.subr.bf16.mxu0 0
          %1216 = vmatpush1.bf16.msra.mxu0 0
          %1217 = vmatprep.subr.bf16.mxu0 0
          %1218 = vmatpush1.bf16.msra.mxu0 0
          %1219 = vmatprep.subr.bf16.mxu0 0
          %1220 = vmatpush1.bf16.msra.mxu0 0
          %1221 = vmatprep.mubr.bf16.mxu0 0
          %1222 = vmatmul.mubr.bf16.gmra.mrb[0].mxu0 %v1187
          %v1223 = vpop.f32.mrb[0].mxu0
          %v1224 = vadd.f32 %v1173, %v1223
          %v1225 = vpop.f32.mrb[0].mxu0
          %v1226 = vadd.f32 %v1175, %v1225
          %v1227 = vpop.f32.mrb[0].mxu0
          %v1228 = vadd.f32 %v1177, %v1227
          %v1229 = vpop.f32.mrb[0].mxu0
          %v1230 = vadd.f32 %v1179, %v1229
          %1231 = vdwg.mxu0
          %v1232 = vmax.f32 %v1224, -30.0
          %v1233 = vmax.f32 %v1226, -30.0
          %v1234 = vmax.f32 %v1228, -30.0
          %v1235 = vmax.f32 %v1230, -30.0
          %v1236 = vmin.f32 %v1232, 30.0
          %v1237 = vmin.f32 %v1233, 30.0
          %v1238 = vmin.f32 %v1234, 30.0
          %v1239 = vmin.f32 %v1235, 30.0
          %v1240 = vmul.f32 %v1236, 1.442695
          %v1241 = vpow.pop %v1240
          %v1242 = vmul.f32 %v1237, 1.442695
          %v1243 = vpow.pop %v1242
          %v1244 = vmul.f32 %v1238, 1.442695
          %v1245 = vpow.pop %v1244
          %v1246 = vmul.f32 %v1239, 1.442695
          %v1247 = vpow.pop %v1246
          %v1248 = vmul.f32 %v1241, %v1241
          %v1249 = vmul.f32 %v1243, %v1243
          %v1250 = vmul.f32 %v1245, %v1245
          %v1251 = vmul.f32 %v1247, %v1247
          %v1252 = vsub.f32 %v1248, %v1241
          %v1253 = vsub.f32 %v1249, %v1243
          %v1254 = vsub.f32 %v1250, %v1245
          %v1255 = vsub.f32 %v1251, %v1247
          %v1256 = vadd.f32 %v1248, 1.0
          %v1257 = vadd.f32 %v1249, 1.0
          %v1258 = vadd.f32 %v1250, 1.0
          %v1259 = vadd.f32 %v1251, 1.0
          %v1260 = vrcp.pop %v1256
          %v1261 = vrcp.pop %v1257
          %v1262 = vrcp.pop %v1258
          %v1263 = vrcp.pop %v1259
          %v1264 = vmul.f32 %v1252, %v1260
          %v1265 = vmul.f32 %v1253, %v1261
          %v1266 = vmul.f32 %v1254, %v1262
          %v1267 = vmul.f32 %v1255, %v1263
          %s1268 = smul.u32 %s1103, 4
          %s1269 = smul.addr %s1268, 4
          %s1270 = scalar_lea.vmem %s5, %s1269
          %v1271 = vld [vmem:[%s1270] sm:$0xf]
          %v1272 = vld [vmem:[%s1270 + $0x4] sm:$0xf]
          %v1273 = vld [vmem:[%s1270 + $0x8] sm:$0xf]
          %v1274 = vld [vmem:[%s1270 + $0xc] sm:$0xf]
          %v1275 = vpack.c.bf16 %v1266, %v1264
          %v1276 = vpack.c.bf16 %v1267, %v1265
          %s1277 = smul.u32 %s1103, 32
          %s1278 = scalar_lea.vmem %s6, %s1277
          %v1279 = vld [vmem:[%s1278] sm:$0xff]
          %v1280 = vld [vmem:[%s1278 + $0x8] sm:$0xff]
          %v1281 = vld [vmem:[%s1278 + $0x10] sm:$0xff]
          %v1282 = vld [vmem:[%s1278 + $0x18] sm:$0xff]
          %1284 = vset.pattern.permute.xlu0 0
          %1285 = vperm.xlu0 %1284, %v1279
          %v1286 = vpop.permute.xlu0 %1285
          %1289 = vset.pattern.permute.xlu0 0
          %1290 = vperm.xlu0 %1289, %v1280
          %v1291 = vpop.permute.xlu0 %1290
          %1294 = vset.pattern.permute.xlu0 0
          %1295 = vperm.xlu0 %1294, %v1281
          %v1296 = vpop.permute.xlu0 %1295
          %1299 = vset.pattern.permute.xlu0 0
          %1300 = vperm.xlu0 %1299, %v1282
          %v1301 = vpop.permute.xlu0 %1300
          %v1307 = vunpack.c.l.b16 %v1271
          %v1308 = vunpack.c.l.b16 %v1272
          %v1309 = vunpack.c.l.b16 %v1273
          %v1310 = vunpack.c.l.b16 %v1274
          %v1311 = vpack.c.b16 %v1308, %v1307
          %v1312 = vpack.c.b16 %v1310, %v1309
          %v1314 = vsel %vm588, %v1311, 0
          %v1317 = vsel %vm588, %v1312, 0
          %1319 = vmatprep.subr.bf16.mxu0 %v1276
          %1320 = vmatpush1.bf16.msra.mxu0 %v1275
          %1321 = vmatprep.subr.bf16.mxu0 0
          %1322 = vmatpush1.bf16.msra.mxu0 0
          %1323 = vmatprep.subr.bf16.mxu0 0
          %1324 = vmatpush1.bf16.msra.mxu0 0
          %1325 = vmatprep.subr.bf16.mxu0 0
          %1326 = vmatpush1.bf16.msra.mxu0 0
          %1327 = vmatprep.subr.bf16.mxu0 0
          %1328 = vmatpush1.bf16.msra.mxu0 0
          %1329 = vmatprep.subr.bf16.mxu0 0
          %1330 = vmatpush1.bf16.msra.mxu0 0
          %1331 = vmatprep.subr.bf16.mxu0 0
          %1332 = vmatpush1.bf16.msra.mxu0 0
          %1333 = vmatprep.subr.bf16.mxu0 0
          %1334 = vmatpush1.bf16.msra.mxu0 0
          %1335 = vmatprep.subr.bf16.mxu0 0
          %1336 = vmatpush1.bf16.msra.mxu0 0
          %1337 = vmatprep.subr.bf16.mxu0 0
          %1338 = vmatpush1.bf16.msra.mxu0 0
          %1339 = vmatprep.subr.bf16.mxu0 0
          %1340 = vmatpush1.bf16.msra.mxu0 0
          %1341 = vmatprep.subr.bf16.mxu0 0
          %1342 = vmatpush1.bf16.msra.mxu0 0
          %1343 = vmatprep.subr.bf16.mxu0 0
          %1344 = vmatpush1.bf16.msra.mxu0 0
          %1345 = vmatprep.subr.bf16.mxu0 0
          %1346 = vmatpush1.bf16.msra.mxu0 0
          %1347 = vmatprep.subr.bf16.mxu0 0
          %1348 = vmatpush1.bf16.msra.mxu0 0
          %1349 = vmatprep.subr.bf16.mxu0 0
          %1350 = vmatpush1.bf16.msra.mxu0 0
          %1351 = vmatprep.mubr.bf16.mxu0 0
          %1352 = vmatmul.mubr.bf16.gmra.mrb[0].mxu0 %v1314
          %v1353 = vpop.f32.mrb[0].mxu0
          %v1354 = vadd.f32 %v1286, %v1353
          %v1355 = vpop.f32.mrb[0].mxu0
          %v1356 = vadd.f32 %v1286, %v1355
          %v1357 = vpop.f32.mrb[0].mxu0
          %v1358 = vadd.f32 %v1291, %v1357
          %v1359 = vpop.f32.mrb[0].mxu0
          %v1360 = vadd.f32 %v1291, %v1359
          %1361 = vmatprep.mubr.bf16.mxu0 0
          %1362 = vmatmul.mubr.bf16.gmra.mrb[0].mxu0 %v1317
          %v1363 = vpop.f32.mrb[0].mxu0
          %v1364 = vpop.f32.mrb[0].mxu0
          %v1365 = vadd.f32 %v1296, %v1364
          %v1366 = vpop.f32.mrb[0].mxu0
          %v1367 = vpop.f32.mrb[0].mxu0
          %v1368 = vadd.f32 %v1301, %v1367
          %1369 = vdwg.mxu0
          %v1370 = vadd.f32 %v1354, %v1097
          %v1371 = vadd.f32 %v1356, %v1098
          %v1372 = vadd.f32 %v1358, %v1099
          %v1373 = vadd.f32 %v1360, %v1100
          %v1374 = vadd.f32 %v1101, %v1365
          %v1375 = vadd.f32 %v1102, %v1368
        $region99: #{tpu_custom_call.1} parent=59 // loop_footer
          %s550 = sadd.s32 1, %s546
        $region100: #{tpu_custom_call.1} parent=59 // loop_footer_branch
          %545 = sbr.rel target = $region96
        $region101: #{tpu_custom_call.1} parent=59 // loop_exit
          _
        %v1376 = vmax.f32 %v555, 0.0
        %v1377 = vmax.f32 %v556, 0.0
        %v1378 = vld [vmem:[%s7] sm:$0xf]
        %v1379 = vld [vmem:[%s7 + $0x4] sm:$0xf]
        %v1380 = vpack.c.bf16 %v1377, %v1376
        %v1381 = vld [vmem:[%s8] sm:$0xff]
        %v1382 = vld [vmem:[%s8 + $0x8] sm:$0xff]
        %1384 = vset.pattern.permute.xlu0 0
        %1385 = vperm.xlu0 %1384, %v1381
        %v1386 = vpop.permute.xlu0 %1385
        %1389 = vset.pattern.permute.xlu0 0
        %1390 = vperm.xlu0 %1389, %v1382
        %v1391 = vpop.permute.xlu0 %1390
        %v1395 = vunpack.c.l.b16 %v1378
        %v1396 = vunpack.c.l.b16 %v1379
        %v1397 = vpack.c.b16 %v1396, %v1395
        %vm1398 = vcmask 130048
        %v1400 = vsel %vm1398, %v1397, 0
        %1402 = vmatprep.subr.bf16.mxu0 0
        %1403 = vmatpush1.bf16.msra.mxu0 %v1380
        %1404 = vmatprep.subr.bf16.mxu0 0
        %1405 = vmatpush1.bf16.msra.mxu0 0
        %1406 = vmatprep.subr.bf16.mxu0 0
        %1407 = vmatpush1.bf16.msra.mxu0 0
        %1408 = vmatprep.subr.bf16.mxu0 0
        %1409 = vmatpush1.bf16.msra.mxu0 0
        %1410 = vmatprep.subr.bf16.mxu0 0
        %1411 = vmatpush1.bf16.msra.mxu0 0
        %1412 = vmatprep.subr.bf16.mxu0 0
        %1413 = vmatpush1.bf16.msra.mxu0 0
        %1414 = vmatprep.subr.bf16.mxu0 0
        %1415 = vmatpush1.bf16.msra.mxu0 0
        %1416 = vmatprep.subr.bf16.mxu0 0
        %1417 = vmatpush1.bf16.msra.mxu0 0
        %1418 = vmatprep.subr.bf16.mxu0 0
        %1419 = vmatpush1.bf16.msra.mxu0 0
        %1420 = vmatprep.subr.bf16.mxu0 0
        %1421 = vmatpush1.bf16.msra.mxu0 0
        %1422 = vmatprep.subr.bf16.mxu0 0
        %1423 = vmatpush1.bf16.msra.mxu0 0
        %1424 = vmatprep.subr.bf16.mxu0 0
        %1425 = vmatpush1.bf16.msra.mxu0 0
        %1426 = vmatprep.subr.bf16.mxu0 0
        %1427 = vmatpush1.bf16.msra.mxu0 0
        %1428 = vmatprep.subr.bf16.mxu0 0
        %1429 = vmatpush1.bf16.msra.mxu0 0
        %1430 = vmatprep.subr.bf16.mxu0 0
        %1431 = vmatpush1.bf16.msra.mxu0 0
        %1432 = vmatprep.subr.bf16.mxu0 0
        %1433 = vmatpush1.bf16.msra.mxu0 0
        %1434 = vmatprep.mubr.bf16.mxu0 0
        %1435 = vmatmul.mubr.bf16.gmra.mrb[0].mxu0 %v1400
        %v1436 = vpop.f32.mrb[0].mxu0
        %v1437 = vadd.f32 %v1386, %v1436
        %v1438 = vpop.f32.mrb[0].mxu0
        %v1439 = vpop.f32.mrb[0].mxu0
        %v1440 = vadd.f32 %v1391, %v1439
        %v1441 = vpop.f32.mrb[0].mxu0
        %1442 = vdwg.mxu0
        %v1443 = vmax.f32 %v1437, 0.0
        %v1444 = vmax.f32 %v1440, 0.0
        %v1445 = vld [vmem:[%s9] sm:$0x3]
        %v1446 = vpack.c.bf16 %v1444, %v1443
        %v1447 = vld [vmem:[%s10] sm:$0xf]
        %1449 = vset.pattern.permute.xlu0 0
        %1450 = vperm.xlu0 %1449, %v1447
        %v1451 = vpop.permute.xlu0 %1450
        %v1454 = vsel %vm1398, %v1445, 0
        %1456 = vmatprep.subr.bf16.mxu0 0
        %1457 = vmatpush1.bf16.msra.mxu0 %v1446
        %1458 = vmatprep.subr.bf16.mxu0 0
        %1459 = vmatpush1.bf16.msra.mxu0 0
        %1460 = vmatprep.subr.bf16.mxu0 0
        %1461 = vmatpush1.bf16.msra.mxu0 0
        %1462 = vmatprep.subr.bf16.mxu0 0
        %1463 = vmatpush1.bf16.msra.mxu0 0
        %1464 = vmatprep.subr.bf16.mxu0 0
        %1465 = vmatpush1.bf16.msra.mxu0 0
        %1466 = vmatprep.subr.bf16.mxu0 0
        %1467 = vmatpush1.bf16.msra.mxu0 0
        %1468 = vmatprep.subr.bf16.mxu0 0
        %1469 = vmatpush1.bf16.msra.mxu0 0
        %1470 = vmatprep.subr.bf16.mxu0 0
        %1471 = vmatpush1.bf16.msra.mxu0 0
        %1472 = vmatprep.subr.bf16.mxu0 0
        %1473 = vmatpush1.bf16.msra.mxu0 0
        %1474 = vmatprep.subr.bf16.mxu0 0
        %1475 = vmatpush1.bf16.msra.mxu0 0
        %1476 = vmatprep.subr.bf16.mxu0 0
        %1477 = vmatpush1.bf16.msra.mxu0 0
        %1478 = vmatprep.subr.bf16.mxu0 0
        %1479 = vmatpush1.bf16.msra.mxu0 0
        %1480 = vmatprep.subr.bf16.mxu0 0
        %1481 = vmatpush1.bf16.msra.mxu0 0
        %1482 = vmatprep.subr.bf16.mxu0 0
        %1483 = vmatpush1.bf16.msra.mxu0 0
        %1484 = vmatprep.subr.bf16.mxu0 0
        %1485 = vmatpush1.bf16.msra.mxu0 0
        %1486 = vmatprep.subr.bf16.mxu0 0
        %1487 = vmatpush1.bf16.msra.mxu0 0
        %1488 = vmatprep.mubr.bf16.mxu0 0
        %1489 = vmatmul.mubr.bf16.gmra.mrb[0].mxu0 %v1454
        %v1490 = vpop.f32.mrb[0].mxu0
        %v1491 = vadd.f32 %v1451, %v1490
        %v1492 = vpop.f32.mrb[0].mxu0
        %v1493 = vpop.f32.mrb[0].mxu0
        %v1494 = vpop.f32.mrb[0].mxu0
        %1495 = vdwg.mxu0
        %vm1496 = vcmask 1043456
        %v1497 = vsel %vm1496, %v1491, -inf
        %v1498 = vrot.slane %v1497, 4
        %v1499 = vmax.f32 %v1497, %v1498
        %v1500 = vrot.slane %v1499, 2
        %v1501 = vmax.f32 %v1499, %v1500
        %v1502 = vrot.slane %v1501, 1
        %v1503 = vmax.f32 %v1501, %v1502
        %v1504 = vsub.f32 %v1491, %v1503
        %v1505 = vmul.f32 %v1504, 1.442695
        %v1506 = vpow.pop %v1505
        %v1507 = vsel %vm1496, %v1506, 0.0
        %v1508 = vrot.slane %v1507, 4
        %v1509 = vadd.f32 %v1507, %v1508
        %v1510 = vrot.slane %v1509, 2
        %v1511 = vadd.f32 %v1509, %v1510
        %v1512 = vrot.slane %v1511, 1
        %v1513 = vadd.f32 %v1511, %v1512
        %v1514 = vrcp.pop %v1513
        %v1515 = vmul.f32 %v1506, %v1514
        %1516 = vst [vmem:[%s352] sm:$0xf] %v1515
        %s1517 = sand.u32 %s257, 1
        %s1518 = scalar_lea.sflag [#allocation5], %s1517
        %s1519 = sand.u32 %s257, 1
        %s1520 = smul.addr %s1519, 4
        %s1521 = scalar_lea.vmem [#allocation4], %s1520
        // Predicated region
        $region102: #{tpu_custom_call.1} parent=59 // pred_check
          %p1522 = pneg %p267
        $region103: #{tpu_custom_call.1} parent=59 // pred_check_branch
          %1524 = sbr.rel (%p1522) target = $region105
        $region104: #{tpu_custom_call.1} parent=59 // pred_region
          %s1526 = ssub.s32 64, 64
          %1527 = vsyncadd %s1518, %s1526
          %s1528 = sadd.s32 %s30, %s29
          %s1529 = smul.addr %s1528, 64
          %s1530 = scalar_lea.hbm %s11, %s1529
          %s1532 = sshll.u32 %s1521, 4
          %s1533 = int_to_ptr.vmem [resolvable:$true] %s1532
          %1535 = dma.vmem_to_hbm [thread:$0]  %s1533, 64, %s1530, %s1518
        $region105: #{tpu_custom_call.1} parent=59 // pred_fallthru
          _
      $region60: #{tpu_custom_call.1} parent=5 // pred_fallthru
        _
      %p1536 = scmp.le.s32.totalorder 2, %s20
      // Predicated region
      $region106: #{tpu_custom_call.1} parent=5 // pred_check
        %p1537 = pneg %p1536
      $region107: #{tpu_custom_call.1} parent=5 // pred_check_branch
        %1539 = sbr.rel (%p1537) target = $region109
      $region108: #{tpu_custom_call.1} parent=5 // pred_region
        %s1540 = ssub.s32 %s20, 2
        // Predicated region
        $region110: #{tpu_custom_call.1} parent=108 // pred_check
          %p1541 = pneg %p273
        $region111: #{tpu_custom_call.1} parent=108 // pred_check_branch
          %1543 = sbr.rel (%p1541) target = $region113
        $region112: #{tpu_custom_call.1} parent=108 // pred_region
          %s1544 = sand.u32 %s258, 1
          %s1545 = scalar_lea.sflag [#allocation5], %s1544
          %s1546 = sand.u32 %s258, 1
          %s1547 = smul.addr %s1546, 4
          %s1548 = scalar_lea.vmem [#allocation4], %s1547
          %1549 = dma.done %s1545, 64
        $region113: #{tpu_custom_call.1} parent=108 // pred_fallthru
          _
      $region109: #{tpu_custom_call.1} parent=5 // pred_fallthru
        _
    $region6: #{tpu_custom_call.1} parent=1 // loop_footer
      %s24 = sadd.s32 1, %s20
    $region7: #{tpu_custom_call.1} parent=1 // loop_footer_branch
      %19 = sbr.rel target = $region3
    $region8: #{tpu_custom_call.1} parent=1 // loop_exit
      _
    %1550 = vsyncpa [#allocation5], 1
    %s1551 = scalar_lea.sflag [#allocation5], 1
    %1552 = vsyncpa %s1551, 1
  %1553 = vsyncmov [#allocation3]
  %s1554 = vpop.sfrf %1553
  %p1555 = scmp.eq.s32.totalorder %s1554, 0
  %p1556 = pneg %p1555
  %1558 = shalt.err (%p1556)

</llo_original>
